<compile_context>
chip_gen: v5e
topology: v5e:2x2
jax: 0.10.0
libtpu: 0.0.40
codegen_flags: <defaults>
</compile_context>

<pallas_src>
import functools

import jax
import jax.numpy as jnp
from jax import lax
from jax.experimental import pallas as pl
from jax.experimental.pallas import tpu as pltpu

LANE = 128
SUBLANE = 8


def _round_up(x, m):
    return (x + m - 1) // m * m


# ------------------------------ Pallas kernel -------------------------------


def _fused_lstm_kernel(*args, num_layers, seq_len, batch_pad, hidden,
                       hidden_pad, gate_pad, param_dtype):
    """Fused multi-layer LSTM + output Linear (single invocation, grid=()).

    Ref layout (in order):
      x_ref      : (T*BP, Dp)  time-major flattened, batch/feature zero-padded
      h0_ref     : (L, BP, Hp) initial hidden states (zero padded)
      c0_ref     : (L, BP, Hp) initial cell states  (zero padded)
      per layer l: wih (D_l, Gp), whh (Hp, Gp), bias (1, Gp)
                   gates packed contiguously i|f|g|o in the first 4*H lanes
      wout_ref   : (Hp, Op)    output Linear weight (rows >= H zero)
      bout_ref   : (1, Op)
      out_ref    : (BP, Op)
      gxA, gxB   : (T, BP, Gp) ping-pong buffers for the per-layer input
                   projections (wavefronted into the previous layer's loop)
    """
    L, T, BP = num_layers, seq_len, batch_pad
    H, Hp, Gp = hidden, hidden_pad, gate_pad

    x_ref, h0_ref, c0_ref = args[0], args[1], args[2]
    layer_refs = args[3:3 + 3 * L]
    wout_ref, bout_ref = args[3 + 3 * L], args[4 + 3 * L]
    out_ref = args[5 + 3 * L]
    gxA_ref, gxB_ref = args[6 + 3 * L], args[7 + 3 * L]

    def aligned_gate(sg, th, k):
        # Bring gate k (lanes [k*H, k*H+H)) down to lanes [0, H) via an XLU
        # lane rotation.  Lanes >= H then hold bounded junk; it only ever
        # multiplies zero-padded state lanes / hits zero weight rows, so the
        # real results stay exact.
        src = th if k == 2 else sg          # g uses tanh; i, f, o use sigmoid
        if k:
            src = pltpu.roll(src, (Gp - k * H) % Gp, 1)
        return src if Gp == Hp else src[:, :Hp]

    # Layer-0 input projection for ALL timesteps in one MXU matmul, bias
    # folded in.
    wih0_ref, b0_ref = layer_refs[0], layer_refs[2]
    gx0 = (jnp.dot(x_ref[...].astype(param_dtype), wih0_ref[...],
                   preferred_element_type=jnp.float32)
           + b0_ref[...])
    gxA_ref[...] = gx0.reshape(T, BP, Gp)

    gx_cur, gx_nxt = gxA_ref, gxB_ref
    h = None
    for l in range(L):
        last_layer = (l == L - 1)
        whh = layer_refs[3 * l + 1][...]          # held across the T steps
        h = h0_ref[l]                             # (BP, Hp) register state
        c = c0_ref[l]
        if not last_layer:
            wih_next = layer_refs[3 * (l + 1)][...]
            b_next = jnp.broadcast_to(layer_refs[3 * (l + 1) + 2][...],
                                      (BP, Gp))   # hoisted broadcast

        # Recurrence, fully unrolled (T is static & tiny). Serial work per
        # step is a single (BP,Hp)@(Hp,Gp) matmul plus vreg elementwise math.
        for t in range(T):
            gates = gx_cur[t] + jnp.dot(h.astype(param_dtype), whh,
                                        preferred_element_type=jnp.float32)
            sg = jax.nn.sigmoid(gates)
            th = jnp.tanh(gates)
            i_g = aligned_gate(sg, th, 0)
            f_g = aligned_gate(sg, th, 1)
            g_g = aligned_gate(sg, th, 2)
            o_g = aligned_gate(sg, th, 3)
            c = f_g * c + i_g * g_g
            h = o_g * jnp.tanh(c)
            if not last_layer:
                # Wavefront: the next layer's input projection for step t is
                # issued here so the MXU fills the slack between this layer's
                # serial h@W_hh pushes.
                gx_nxt[t] = (jnp.dot(h.astype(param_dtype), wih_next,
                                     preferred_element_type=jnp.float32)
                             + b_next)
        gx_cur, gx_nxt = gx_nxt, gx_cur

    # Fused output Linear on the final layer's last hidden state (lane-dense).
    out_ref[...] = (jnp.dot(h.astype(param_dtype), wout_ref[...],
                            preferred_element_type=jnp.float32)
                    + bout_ref[...])


# ------------------------------ JAX wrappers ---------------------------------


def pad_lstm_params(raw_layers, w_out, b_out, *, hidden_size, input_size,
                    param_dtype=jnp.float32):
    """Transpose + zero-pad PyTorch-layout LSTM params, gates packed i|f|g|o.

    raw_layers: list of (w_ih (4H, D_in), w_hh (4H, H), b_ih (4H,), b_hh (4H,))
    Weights may be cast to `param_dtype` (bf16 on v6e/v7x); biases stay f32.
    All padding is zero so padded lanes never leak into real outputs.
    """
    H = hidden_size
    Hp = _round_up(H, LANE)
    Gp = _round_up(4 * H, LANE)
    Dp = _round_up(input_size, LANE)

    padded = []
    for l, (w_ih, w_hh, b_ih, b_hh) in enumerate(raw_layers):
        d_in = w_ih.shape[1]
        d_pad = Dp if l == 0 else Hp
        wih_p = jnp.zeros((d_pad, Gp), jnp.float32).at[:d_in, :4 * H].set(w_ih.T)
        whh_p = jnp.zeros((Hp, Gp), jnp.float32).at[:H, :4 * H].set(w_hh.T)
        b_p = jnp.zeros((1, Gp), jnp.float32).at[:, :4 * H].set(
            (b_ih + b_hh)[None, :])
        padded.append((wih_p.astype(param_dtype), whh_p.astype(param_dtype),
                       b_p))

    O = w_out.shape[0]
    Op = _round_up(O, LANE)
    wout_p = (jnp.zeros((Hp, Op), jnp.float32).at[:H, :O].set(w_out.T)
              .astype(param_dtype))
    bout_p = jnp.zeros((1, Op), jnp.float32).at[:, :O].set(b_out[None, :])
    return padded, wout_p, bout_p


def lstm_forward(x, h0, c0, padded_layers, wout_p, bout_p, *, hidden_size,
                 output_size, param_dtype=jnp.float32):
    """Equivalent of LSTM.forward: x is (B, T, D_in) batch_first -> (B, O)."""
    B, T, D_in = x.shape
    L = len(padded_layers)
    H = hidden_size
    Dp = padded_layers[0][0].shape[0]
    Gp = padded_layers[0][0].shape[1]
    Hp = wout_p.shape[0]
    Op = wout_p.shape[1]
    BP = _round_up(B, SUBLANE)

    # Time-major, batch padded to the sublane height, features padded to 128
    # lanes; flattened so row index = t*BP + b.
    x_pad = jnp.zeros((T, BP, Dp), jnp.float32)
    x_pad = x_pad.at[:, :B, :D_in].set(jnp.transpose(x, (1, 0, 2)))
    x_flat = x_pad.reshape(T * BP, Dp)

    # Zero-pad initial states along batch and hidden axes.
    h0p = jnp.zeros((L, BP, Hp), jnp.float32).at[:, :B, :H].set(h0)
    c0p = jnp.zeros((L, BP, Hp), jnp.float32).at[:, :B, :H].set(c0)

    kernel = functools.partial(
        _fused_lstm_kernel, num_layers=L, seq_len=T, batch_pad=BP, hidden=H,
        hidden_pad=Hp, gate_pad=Gp, param_dtype=param_dtype)

    def full(shape):
        return pl.BlockSpec(shape, lambda: (0,) * len(shape))

    in_specs = [full(x_flat.shape), full(h0p.shape), full(c0p.shape)]
    inputs = [x_flat, h0p, c0p]
    for (wih_p, whh_p, b_p) in padded_layers:
        in_specs += [full(wih_p.shape), full(whh_p.shape), full(b_p.shape)]
        inputs += [wih_p, whh_p, b_p]
    in_specs += [full(wout_p.shape), full(bout_p.shape)]
    inputs += [wout_p, bout_p]

    out = pl.pallas_call(
        kernel,
        out_shape=jax.ShapeDtypeStruct((BP, Op), jnp.float32),
        in_specs=in_specs,
        out_specs=full((BP, Op)),
        scratch_shapes=[
            pltpu.VMEM((T, BP, Gp), jnp.float32),   # gx ping buffer
            pltpu.VMEM((T, BP, Gp), jnp.float32),   # gx pong buffer
        ],
    )(*inputs)
    return out[:B, :output_size]


# ------------------------------ reference (plain JAX) ------------------------


def lstm_reference(inputseq, h0, c0, layer_params, w_out_t, b_out):
    seq = jnp.transpose(inputseq, (1, 0, 2))
    for l, (wih_t, whh_t, bias) in enumerate(layer_params):
        def step(carry, x_t, wih_t=wih_t, whh_t=whh_t, bias=bias):
            h, c = carry
            gates = x_t @ wih_t + h @ whh_t + bias[0]
            i, f, g, o = jnp.split(gates, 4, axis=-1)
            c = jax.nn.sigmoid(f) * c + jax.nn.sigmoid(i) * jnp.tanh(g)
            h = jax.nn.sigmoid(o) * jnp.tanh(c)
            return (h, c), h
        (_, _), seq = lax.scan(step, (h0[l], c0[l]), seq)
    return seq[-1] @ w_out_t + b_out[0]


# ------------------------------ main -----------------------------------------


if __name__ == "__main__":
    # Module hyperparameters (small, consistent with the PyTorch module).
    batch_size = 2
    seq_len = 8
    input_size = 4
    hidden_size = 32
    num_layers = 2
    output_size = 4

    key = jax.random.PRNGKey(0)
    keys = jax.random.split(key, 4 * num_layers + 6)
    k = 1.0 / jnp.sqrt(hidden_size)   # PyTorch default uniform(-k, k) init

    # Deterministic synthetic parameters (PyTorch gate order i, f, g, o).
    raw_layers = []
    for l in range(num_layers):
        d_in = input_size if l == 0 else hidden_size
        kw = keys[4 * l:4 * l + 4]
        w_ih = jax.random.uniform(kw[0], (4 * hidden_size, d_in),
                                  minval=-k, maxval=k, dtype=jnp.float32)
        w_hh = jax.random.uniform(kw[1], (4 * hidden_size, hidden_size),
                                  minval=-k, maxval=k, dtype=jnp.float32)
        b_ih = jax.random.uniform(kw[2], (4 * hidden_size,),
                                  minval=-k, maxval=k, dtype=jnp.float32)
        b_hh = jax.random.uniform(kw[3], (4 * hidden_size,),
                                  minval=-k, maxval=k, dtype=jnp.float32)
        raw_layers.append((w_ih, w_hh, b_ih, b_hh))

    w_out = jax.random.uniform(keys[-6], (output_size, hidden_size),
                               minval=-k, maxval=k, dtype=jnp.float32)
    b_out = jax.random.uniform(keys[-5], (output_size,),
                               minval=-k, maxval=k, dtype=jnp.float32)

    # Input sequence and the torch.randn(h_0)/torch.randn(c_0) states, drawn
    # deterministically here (the module draws them randomly every forward).
    x = jax.random.normal(keys[-4], (batch_size, seq_len, input_size),
                          dtype=jnp.float32)
    h0 = jax.random.normal(keys[-3], (num_layers, batch_size, hidden_size),
                           dtype=jnp.float32)
    c0 = jax.random.normal(keys[-2], (num_layers, batch_size, hidden_size),
                           dtype=jnp.float32)

    ref_layers = [(w_ih.T, w_hh.T, (b_ih + b_hh)[None, :])
                  for (w_ih, w_hh, b_ih, b_hh) in raw_layers]
    ref = lstm_reference(x, h0, c0, ref_layers, w_out.T, b_out[None, :])

    # f32 weights (tight tolerance everywhere) + bf16 weights (v6e/v7x MXU
    # path; elementwise math and h/c state stay f32, so it is v5e-safe too).
    for param_dtype, tol in ((jnp.float32, 1e-4), (jnp.bfloat16, 5e-2)):
        padded_layers, wout_p, bout_p = pad_lstm_params(
            raw_layers, w_out, b_out, hidden_size=hidden_size,
            input_size=input_size, param_dtype=param_dtype)
        pred = lstm_forward(x, h0, c0, padded_layers, wout_p, bout_p,
                            hidden_size=hidden_size, output_size=output_size,
                            param_dtype=param_dtype)
        pred = jax.block_until_ready(pred)
        assert pred.shape == (batch_size, output_size)
        assert jnp.allclose(pred, ref, rtol=tol, atol=tol), \
            (param_dtype, pred, ref)

    print("KERNEL_OK")
</pallas_src>

<mosaic_0001>
module attributes {stable_mosaic.version = 11 : i64} {
  func.func @_fused_lstm_kernel(%arg0: memref<64x128xf32, #tpu.memory_space<vmem>>, %arg1: memref<2x8x128xf32, #tpu.memory_space<vmem>>, %arg2: memref<2x8x128xf32, #tpu.memory_space<vmem>>, %arg3: memref<128x128xf32, #tpu.memory_space<vmem>>, %arg4: memref<128x128xf32, #tpu.memory_space<vmem>>, %arg5: memref<1x128xf32, #tpu.memory_space<vmem>>, %arg6: memref<128x128xf32, #tpu.memory_space<vmem>>, %arg7: memref<128x128xf32, #tpu.memory_space<vmem>>, %arg8: memref<1x128xf32, #tpu.memory_space<vmem>>, %arg9: memref<128x128xf32, #tpu.memory_space<vmem>>, %arg10: memref<1x128xf32, #tpu.memory_space<vmem>>, %arg11: memref<8x128xf32, #tpu.memory_space<vmem>>, %arg12: memref<8x8x128xf32, #tpu.memory_space<vmem>>, %arg13: memref<8x8x128xf32, #tpu.memory_space<vmem>>) attributes {dimension_semantics = [], scalar_prefetch = 0 : i64, scratch_operands = 2 : i64, tpu.core_type = #tpu.core_type<tc>} {
    %c0 = arith.constant 0 : index
    %c0_0 = arith.constant 0 : index
    %0 = vector.load %arg0[%c0, %c0_0] : memref<64x128xf32, #tpu.memory_space<vmem>>, vector<64x128xf32>
    %c0_1 = arith.constant 0 : index
    %c0_2 = arith.constant 0 : index
    %1 = vector.load %arg3[%c0_1, %c0_2] : memref<128x128xf32, #tpu.memory_space<vmem>>, vector<128x128xf32>
    %cst = arith.constant dense<0.000000e+00> : vector<64x128xf32>
    %2 = tpu.matmul %0, %1, %cst {dimension_numbers = #tpu.dot_dimension_numbers<[1], [0], [0], [1], [0, 0, 1, 1], [], []>} : vector<64x128xf32>, vector<128x128xf32>, vector<64x128xf32> -> vector<64x128xf32>
    %c0_3 = arith.constant 0 : index
    %c0_4 = arith.constant 0 : index
    %3 = vector.load %arg5[%c0_3, %c0_4] : memref<1x128xf32, #tpu.memory_space<vmem>>, vector<1x128xf32>
    %4 = vector.broadcast %3 : vector<1x128xf32> to vector<64x128xf32>
    %5 = arith.addf %2, %4 : vector<64x128xf32>
    %6 = vector.shape_cast %5 : vector<64x128xf32> to vector<8x8x128xf32>
    %c0_5 = arith.constant 0 : index
    %c0_6 = arith.constant 0 : index
    %c0_7 = arith.constant 0 : index
    %7 = vector.load %arg12[%c0_5, %c0_6, %c0_7] : memref<8x8x128xf32, #tpu.memory_space<vmem>>, vector<8x8x128xf32>
    tpu.vector_store %arg12[%c0_5, %c0_6, %c0_7], %6 {strides = array<i32>} : memref<8x8x128xf32, #tpu.memory_space<vmem>>, vector<8x8x128xf32>,
    %c0_8 = arith.constant 0 : index
    %c0_9 = arith.constant 0 : index
    %8 = vector.load %arg4[%c0_8, %c0_9] : memref<128x128xf32, #tpu.memory_space<vmem>>, vector<128x128xf32>
    %c0_10 = arith.constant 0 : index
    %c0_11 = arith.constant 0 : index
    %c0_12 = arith.constant 0 : index
    %9 = vector.load %arg1[%c0_10, %c0_11, %c0_12] : memref<2x8x128xf32, #tpu.memory_space<vmem>>, vector<1x8x128xf32>
    %10 = vector.shape_cast %9 : vector<1x8x128xf32> to vector<8x128xf32>
    %c0_13 = arith.constant 0 : index
    %c0_14 = arith.constant 0 : index
    %c0_15 = arith.constant 0 : index
    %11 = vector.load %arg2[%c0_13, %c0_14, %c0_15] : memref<2x8x128xf32, #tpu.memory_space<vmem>>, vector<1x8x128xf32>
    %12 = vector.shape_cast %11 : vector<1x8x128xf32> to vector<8x128xf32>
    %c0_16 = arith.constant 0 : index
    %c0_17 = arith.constant 0 : index
    %13 = vector.load %arg6[%c0_16, %c0_17] : memref<128x128xf32, #tpu.memory_space<vmem>>, vector<128x128xf32>
    %c0_18 = arith.constant 0 : index
    %c0_19 = arith.constant 0 : index
    %14 = vector.load %arg8[%c0_18, %c0_19] : memref<1x128xf32, #tpu.memory_space<vmem>>, vector<1x128xf32>
    %15 = vector.shape_cast %14 : vector<1x128xf32> to vector<1x128xf32>
    %16 = vector.broadcast %15 : vector<1x128xf32> to vector<8x128xf32>
    %c0_20 = arith.constant 0 : index
    %c0_21 = arith.constant 0 : index
    %c0_22 = arith.constant 0 : index
    %17 = vector.load %arg12[%c0_20, %c0_21, %c0_22] : memref<8x8x128xf32, #tpu.memory_space<vmem>>, vector<1x8x128xf32>
    %18 = vector.shape_cast %17 : vector<1x8x128xf32> to vector<8x128xf32>
    %cst_23 = arith.constant dense<0.000000e+00> : vector<8x128xf32>
    %19 = tpu.matmul %10, %8, %cst_23 {dimension_numbers = #tpu.dot_dimension_numbers<[1], [0], [0], [1], [0, 0, 1, 1], [], []>} : vector<8x128xf32>, vector<128x128xf32>, vector<8x128xf32> -> vector<8x128xf32>
    %20 = arith.addf %18, %19 : vector<8x128xf32>
    %21 = arith.negf %20 : vector<8x128xf32>
    %22 = math.exp %21 : vector<8x128xf32>
    %cst_24 = arith.constant 1.000000e+00 : f32
    %23 = vector.broadcast %cst_24 : f32 to vector<8x128xf32>
    %24 = arith.addf %23, %22 : vector<8x128xf32>
    %25 = arith.divf %23, %24 : vector<8x128xf32>
    %26 = math.tanh %20 : vector<8x128xf32>
    %c96_i32 = arith.constant 96 : i32
    %27 = tpu.dynamic_rotate %25 by %c96_i32 dim 1 : vector<8x128xf32>, i32 -> vector<8x128xf32>
    %c64_i32 = arith.constant 64 : i32
    %28 = tpu.dynamic_rotate %26 by %c64_i32 dim 1 : vector<8x128xf32>, i32 -> vector<8x128xf32>
    %c32_i32 = arith.constant 32 : i32
    %29 = tpu.dynamic_rotate %25 by %c32_i32 dim 1 : vector<8x128xf32>, i32 -> vector<8x128xf32>
    %30 = arith.mulf %27, %12 : vector<8x128xf32>
    %31 = arith.mulf %25, %28 : vector<8x128xf32>
    %32 = arith.addf %30, %31 : vector<8x128xf32>
    %33 = math.tanh %32 : vector<8x128xf32>
    %34 = arith.mulf %29, %33 : vector<8x128xf32>
    %cst_25 = arith.constant dense<0.000000e+00> : vector<8x128xf32>
    %35 = tpu.matmul %34, %13, %cst_25 {dimension_numbers = #tpu.dot_dimension_numbers<[1], [0], [0], [1], [0, 0, 1, 1], [], []>} : vector<8x128xf32>, vector<128x128xf32>, vector<8x128xf32> -> vector<8x128xf32>
    %36 = arith.addf %35, %16 : vector<8x128xf32>
    %c0_26 = arith.constant 0 : index
    %c0_27 = arith.constant 0 : index
    %c0_28 = arith.constant 0 : index
    %37 = vector.load %arg13[%c0_26, %c0_27, %c0_28] : memref<8x8x128xf32, #tpu.memory_space<vmem>>, vector<1x8x128xf32>
    %38 = vector.shape_cast %37 : vector<1x8x128xf32> to vector<8x128xf32>
    %39 = vector.shape_cast %36 : vector<8x128xf32> to vector<1x8x128xf32>
    tpu.vector_store %arg13[%c0_26, %c0_27, %c0_28], %39 {strides = array<i32>} : memref<8x8x128xf32, #tpu.memory_space<vmem>>, vector<1x8x128xf32>,
    %c1 = arith.constant 1 : index
    %c0_29 = arith.constant 0 : index
    %c0_30 = arith.constant 0 : index
    %40 = vector.load %arg12[%c1, %c0_29, %c0_30] : memref<8x8x128xf32, #tpu.memory_space<vmem>>, vector<1x8x128xf32>
    %41 = vector.shape_cast %40 : vector<1x8x128xf32> to vector<8x128xf32>
    %cst_31 = arith.constant dense<0.000000e+00> : vector<8x128xf32>
    %42 = tpu.matmul %34, %8, %cst_31 {dimension_numbers = #tpu.dot_dimension_numbers<[1], [0], [0], [1], [0, 0, 1, 1], [], []>} : vector<8x128xf32>, vector<128x128xf32>, vector<8x128xf32> -> vector<8x128xf32>
    %43 = arith.addf %41, %42 : vector<8x128xf32>
    %44 = arith.negf %43 : vector<8x128xf32>
    %45 = math.exp %44 : vector<8x128xf32>
    %cst_32 = arith.constant 1.000000e+00 : f32
    %46 = vector.broadcast %cst_32 : f32 to vector<8x128xf32>
    %47 = arith.addf %46, %45 : vector<8x128xf32>
    %48 = arith.divf %46, %47 : vector<8x128xf32>
    %49 = math.tanh %43 : vector<8x128xf32>
    %c96_i32_33 = arith.constant 96 : i32
    %50 = tpu.dynamic_rotate %48 by %c96_i32_33 dim 1 : vector<8x128xf32>, i32 -> vector<8x128xf32>
    %c64_i32_34 = arith.constant 64 : i32
    %51 = tpu.dynamic_rotate %49 by %c64_i32_34 dim 1 : vector<8x128xf32>, i32 -> vector<8x128xf32>
    %c32_i32_35 = arith.constant 32 : i32
    %52 = tpu.dynamic_rotate %48 by %c32_i32_35 dim 1 : vector<8x128xf32>, i32 -> vector<8x128xf32>
    %53 = arith.mulf %50, %32 : vector<8x128xf32>
    %54 = arith.mulf %48, %51 : vector<8x128xf32>
    %55 = arith.addf %53, %54 : vector<8x128xf32>
    %56 = math.tanh %55 : vector<8x128xf32>
    %57 = arith.mulf %52, %56 : vector<8x128xf32>
    %cst_36 = arith.constant dense<0.000000e+00> : vector<8x128xf32>
    %58 = tpu.matmul %57, %13, %cst_36 {dimension_numbers = #tpu.dot_dimension_numbers<[1], [0], [0], [1], [0, 0, 1, 1], [], []>} : vector<8x128xf32>, vector<128x128xf32>, vector<8x128xf32> -> vector<8x128xf32>
    %59 = arith.addf %58, %16 : vector<8x128xf32>
    %c1_37 = arith.constant 1 : index
    %c0_38 = arith.constant 0 : index
    %c0_39 = arith.constant 0 : index
    %60 = vector.load %arg13[%c1_37, %c0_38, %c0_39] : memref<8x8x128xf32, #tpu.memory_space<vmem>>, vector<1x8x128xf32>
    %61 = vector.shape_cast %60 : vector<1x8x128xf32> to vector<8x128xf32>
    %62 = vector.shape_cast %59 : vector<8x128xf32> to vector<1x8x128xf32>
    tpu.vector_store %arg13[%c1_37, %c0_38, %c0_39], %62 {strides = array<i32>} : memref<8x8x128xf32, #tpu.memory_space<vmem>>, vector<1x8x128xf32>,
    %c2 = arith.constant 2 : index
    %c0_40 = arith.constant 0 : index
    %c0_41 = arith.constant 0 : index
    %63 = vector.load %arg12[%c2, %c0_40, %c0_41] : memref<8x8x128xf32, #tpu.memory_space<vmem>>, vector<1x8x128xf32>
    %64 = vector.shape_cast %63 : vector<1x8x128xf32> to vector<8x128xf32>
    %cst_42 = arith.constant dense<0.000000e+00> : vector<8x128xf32>
    %65 = tpu.matmul %57, %8, %cst_42 {dimension_numbers = #tpu.dot_dimension_numbers<[1], [0], [0], [1], [0, 0, 1, 1], [], []>} : vector<8x128xf32>, vector<128x128xf32>, vector<8x128xf32> -> vector<8x128xf32>
    %66 = arith.addf %64, %65 : vector<8x128xf32>
    %67 = arith.negf %66 : vector<8x128xf32>
    %68 = math.exp %67 : vector<8x128xf32>
    %cst_43 = arith.constant 1.000000e+00 : f32
    %69 = vector.broadcast %cst_43 : f32 to vector<8x128xf32>
    %70 = arith.addf %69, %68 : vector<8x128xf32>
    %71 = arith.divf %69, %70 : vector<8x128xf32>
    %72 = math.tanh %66 : vector<8x128xf32>
    %c96_i32_44 = arith.constant 96 : i32
    %73 = tpu.dynamic_rotate %71 by %c96_i32_44 dim 1 : vector<8x128xf32>, i32 -> vector<8x128xf32>
    %c64_i32_45 = arith.constant 64 : i32
    %74 = tpu.dynamic_rotate %72 by %c64_i32_45 dim 1 : vector<8x128xf32>, i32 -> vector<8x128xf32>
    %c32_i32_46 = arith.constant 32 : i32
    %75 = tpu.dynamic_rotate %71 by %c32_i32_46 dim 1 : vector<8x128xf32>, i32 -> vector<8x128xf32>
    %76 = arith.mulf %73, %55 : vector<8x128xf32>
    %77 = arith.mulf %71, %74 : vector<8x128xf32>
    %78 = arith.addf %76, %77 : vector<8x128xf32>
    %79 = math.tanh %78 : vector<8x128xf32>
    %80 = arith.mulf %75, %79 : vector<8x128xf32>
    %cst_47 = arith.constant dense<0.000000e+00> : vector<8x128xf32>
    %81 = tpu.matmul %80, %13, %cst_47 {dimension_numbers = #tpu.dot_dimension_numbers<[1], [0], [0], [1], [0, 0, 1, 1], [], []>} : vector<8x128xf32>, vector<128x128xf32>, vector<8x128xf32> -> vector<8x128xf32>
    %82 = arith.addf %81, %16 : vector<8x128xf32>
    %c2_48 = arith.constant 2 : index
    %c0_49 = arith.constant 0 : index
    %c0_50 = arith.constant 0 : index
    %83 = vector.load %arg13[%c2_48, %c0_49, %c0_50] : memref<8x8x128xf32, #tpu.memory_space<vmem>>, vector<1x8x128xf32>
    %84 = vector.shape_cast %83 : vector<1x8x128xf32> to vector<8x128xf32>
    %85 = vector.shape_cast %82 : vector<8x128xf32> to vector<1x8x128xf32>
    tpu.vector_store %arg13[%c2_48, %c0_49, %c0_50], %85 {strides = array<i32>} : memref<8x8x128xf32, #tpu.memory_space<vmem>>, vector<1x8x128xf32>,
    %c3 = arith.constant 3 : index
    %c0_51 = arith.constant 0 : index
    %c0_52 = arith.constant 0 : index
    %86 = vector.load %arg12[%c3, %c0_51, %c0_52] : memref<8x8x128xf32, #tpu.memory_space<vmem>>, vector<1x8x128xf32>
    %87 = vector.shape_cast %86 : vector<1x8x128xf32> to vector<8x128xf32>
    %cst_53 = arith.constant dense<0.000000e+00> : vector<8x128xf32>
    %88 = tpu.matmul %80, %8, %cst_53 {dimension_numbers = #tpu.dot_dimension_numbers<[1], [0], [0], [1], [0, 0, 1, 1], [], []>} : vector<8x128xf32>, vector<128x128xf32>, vector<8x128xf32> -> vector<8x128xf32>
    %89 = arith.addf %87, %88 : vector<8x128xf32>
    %90 = arith.negf %89 : vector<8x128xf32>
    %91 = math.exp %90 : vector<8x128xf32>
    %cst_54 = arith.constant 1.000000e+00 : f32
    %92 = vector.broadcast %cst_54 : f32 to vector<8x128xf32>
    %93 = arith.addf %92, %91 : vector<8x128xf32>
    %94 = arith.divf %92, %93 : vector<8x128xf32>
    %95 = math.tanh %89 : vector<8x128xf32>
    %c96_i32_55 = arith.constant 96 : i32
    %96 = tpu.dynamic_rotate %94 by %c96_i32_55 dim 1 : vector<8x128xf32>, i32 -> vector<8x128xf32>
    %c64_i32_56 = arith.constant 64 : i32
    %97 = tpu.dynamic_rotate %95 by %c64_i32_56 dim 1 : vector<8x128xf32>, i32 -> vector<8x128xf32>
    %c32_i32_57 = arith.constant 32 : i32
    %98 = tpu.dynamic_rotate %94 by %c32_i32_57 dim 1 : vector<8x128xf32>, i32 -> vector<8x128xf32>
    %99 = arith.mulf %96, %78 : vector<8x128xf32>
    %100 = arith.mulf %94, %97 : vector<8x128xf32>
    %101 = arith.addf %99, %100 : vector<8x128xf32>
    %102 = math.tanh %101 : vector<8x128xf32>
    %103 = arith.mulf %98, %102 : vector<8x128xf32>
    %cst_58 = arith.constant dense<0.000000e+00> : vector<8x128xf32>
    %104 = tpu.matmul %103, %13, %cst_58 {dimension_numbers = #tpu.dot_dimension_numbers<[1], [0], [0], [1], [0, 0, 1, 1], [], []>} : vector<8x128xf32>, vector<128x128xf32>, vector<8x128xf32> -> vector<8x128xf32>
    %105 = arith.addf %104, %16 : vector<8x128xf32>
    %c3_59 = arith.constant 3 : index
    %c0_60 = arith.constant 0 : index
    %c0_61 = arith.constant 0 : index
    %106 = vector.load %arg13[%c3_59, %c0_60, %c0_61] : memref<8x8x128xf32, #tpu.memory_space<vmem>>, vector<1x8x128xf32>
    %107 = vector.shape_cast %106 : vector<1x8x128xf32> to vector<8x128xf32>
    %108 = vector.shape_cast %105 : vector<8x128xf32> to vector<1x8x128xf32>
    tpu.vector_store %arg13[%c3_59, %c0_60, %c0_61], %108 {strides = array<i32>} : memref<8x8x128xf32, #tpu.memory_space<vmem>>, vector<1x8x128xf32>,
    %c4 = arith.constant 4 : index
    %c0_62 = arith.constant 0 : index
    %c0_63 = arith.constant 0 : index
    %109 = vector.load %arg12[%c4, %c0_62, %c0_63] : memref<8x8x128xf32, #tpu.memory_space<vmem>>, vector<1x8x128xf32>
    %110 = vector.shape_cast %109 : vector<1x8x128xf32> to vector<8x128xf32>
    %cst_64 = arith.constant dense<0.000000e+00> : vector<8x128xf32>
    %111 = tpu.matmul %103, %8, %cst_64 {dimension_numbers = #tpu.dot_dimension_numbers<[1], [0], [0], [1], [0, 0, 1, 1], [], []>} : vector<8x128xf32>, vector<128x128xf32>, vector<8x128xf32> -> vector<8x128xf32>
    %112 = arith.addf %110, %111 : vector<8x128xf32>
    %113 = arith.negf %112 : vector<8x128xf32>
    %114 = math.exp %113 : vector<8x128xf32>
    %cst_65 = arith.constant 1.000000e+00 : f32
    %115 = vector.broadcast %cst_65 : f32 to vector<8x128xf32>
    %116 = arith.addf %115, %114 : vector<8x128xf32>
    %117 = arith.divf %115, %116 : vector<8x128xf32>
    %118 = math.tanh %112 : vector<8x128xf32>
    %c96_i32_66 = arith.constant 96 : i32
    %119 = tpu.dynamic_rotate %117 by %c96_i32_66 dim 1 : vector<8x128xf32>, i32 -> vector<8x128xf32>
    %c64_i32_67 = arith.constant 64 : i32
    %120 = tpu.dynamic_rotate %118 by %c64_i32_67 dim 1 : vector<8x128xf32>, i32 -> vector<8x128xf32>
    %c32_i32_68 = arith.constant 32 : i32
    %121 = tpu.dynamic_rotate %117 by %c32_i32_68 dim 1 : vector<8x128xf32>, i32 -> vector<8x128xf32>
    %122 = arith.mulf %119, %101 : vector<8x128xf32>
    %123 = arith.mulf %117, %120 : vector<8x128xf32>
    %124 = arith.addf %122, %123 : vector<8x128xf32>
    %125 = math.tanh %124 : vector<8x128xf32>
    %126 = arith.mulf %121, %125 : vector<8x128xf32>
    %cst_69 = arith.constant dense<0.000000e+00> : vector<8x128xf32>
    %127 = tpu.matmul %126, %13, %cst_69 {dimension_numbers = #tpu.dot_dimension_numbers<[1], [0], [0], [1], [0, 0, 1, 1], [], []>} : vector<8x128xf32>, vector<128x128xf32>, vector<8x128xf32> -> vector<8x128xf32>
    %128 = arith.addf %127, %16 : vector<8x128xf32>
    %c4_70 = arith.constant 4 : index
    %c0_71 = arith.constant 0 : index
    %c0_72 = arith.constant 0 : index
    %129 = vector.load %arg13[%c4_70, %c0_71, %c0_72] : memref<8x8x128xf32, #tpu.memory_space<vmem>>, vector<1x8x128xf32>
    %130 = vector.shape_cast %129 : vector<1x8x128xf32> to vector<8x128xf32>
    %131 = vector.shape_cast %128 : vector<8x128xf32> to vector<1x8x128xf32>
    tpu.vector_store %arg13[%c4_70, %c0_71, %c0_72], %131 {strides = array<i32>} : memref<8x8x128xf32, #tpu.memory_space<vmem>>, vector<1x8x128xf32>,
    %c5 = arith.constant 5 : index
    %c0_73 = arith.constant 0 : index
    %c0_74 = arith.constant 0 : index
    %132 = vector.load %arg12[%c5, %c0_73, %c0_74] : memref<8x8x128xf32, #tpu.memory_space<vmem>>, vector<1x8x128xf32>
    %133 = vector.shape_cast %132 : vector<1x8x128xf32> to vector<8x128xf32>
    %cst_75 = arith.constant dense<0.000000e+00> : vector<8x128xf32>
    %134 = tpu.matmul %126, %8, %cst_75 {dimension_numbers = #tpu.dot_dimension_numbers<[1], [0], [0], [1], [0, 0, 1, 1], [], []>} : vector<8x128xf32>, vector<128x128xf32>, vector<8x128xf32> -> vector<8x128xf32>
    %135 = arith.addf %133, %134 : vector<8x128xf32>
    %136 = arith.negf %135 : vector<8x128xf32>
    %137 = math.exp %136 : vector<8x128xf32>
    %cst_76 = arith.constant 1.000000e+00 : f32
    %138 = vector.broadcast %cst_76 : f32 to vector<8x128xf32>
    %139 = arith.addf %138, %137 : vector<8x128xf32>
    %140 = arith.divf %138, %139 : vector<8x128xf32>
    %141 = math.tanh %135 : vector<8x128xf32>
    %c96_i32_77 = arith.constant 96 : i32
    %142 = tpu.dynamic_rotate %140 by %c96_i32_77 dim 1 : vector<8x128xf32>, i32 -> vector<8x128xf32>
    %c64_i32_78 = arith.constant 64 : i32
    %143 = tpu.dynamic_rotate %141 by %c64_i32_78 dim 1 : vector<8x128xf32>, i32 -> vector<8x128xf32>
    %c32_i32_79 = arith.constant 32 : i32
    %144 = tpu.dynamic_rotate %140 by %c32_i32_79 dim 1 : vector<8x128xf32>, i32 -> vector<8x128xf32>
    %145 = arith.mulf %142, %124 : vector<8x128xf32>
    %146 = arith.mulf %140, %143 : vector<8x128xf32>
    %147 = arith.addf %145, %146 : vector<8x128xf32>
    %148 = math.tanh %147 : vector<8x128xf32>
    %149 = arith.mulf %144, %148 : vector<8x128xf32>
    %cst_80 = arith.constant dense<0.000000e+00> : vector<8x128xf32>
    %150 = tpu.matmul %149, %13, %cst_80 {dimension_numbers = #tpu.dot_dimension_numbers<[1], [0], [0], [1], [0, 0, 1, 1], [], []>} : vector<8x128xf32>, vector<128x128xf32>, vector<8x128xf32> -> vector<8x128xf32>
    %151 = arith.addf %150, %16 : vector<8x128xf32>
    %c5_81 = arith.constant 5 : index
    %c0_82 = arith.constant 0 : index
    %c0_83 = arith.constant 0 : index
    %152 = vector.load %arg13[%c5_81, %c0_82, %c0_83] : memref<8x8x128xf32, #tpu.memory_space<vmem>>, vector<1x8x128xf32>
    %153 = vector.shape_cast %152 : vector<1x8x128xf32> to vector<8x128xf32>
    %154 = vector.shape_cast %151 : vector<8x128xf32> to vector<1x8x128xf32>
    tpu.vector_store %arg13[%c5_81, %c0_82, %c0_83], %154 {strides = array<i32>} : memref<8x8x128xf32, #tpu.memory_space<vmem>>, vector<1x8x128xf32>,
    %c6 = arith.constant 6 : index
    %c0_84 = arith.constant 0 : index
    %c0_85 = arith.constant 0 : index
    %155 = vector.load %arg12[%c6, %c0_84, %c0_85] : memref<8x8x128xf32, #tpu.memory_space<vmem>>, vector<1x8x128xf32>
    %156 = vector.shape_cast %155 : vector<1x8x128xf32> to vector<8x128xf32>
    %cst_86 = arith.constant dense<0.000000e+00> : vector<8x128xf32>
    %157 = tpu.matmul %149, %8, %cst_86 {dimension_numbers = #tpu.dot_dimension_numbers<[1], [0], [0], [1], [0, 0, 1, 1], [], []>} : vector<8x128xf32>, vector<128x128xf32>, vector<8x128xf32> -> vector<8x128xf32>
    %158 = arith.addf %156, %157 : vector<8x128xf32>
    %159 = arith.negf %158 : vector<8x128xf32>
    %160 = math.exp %159 : vector<8x128xf32>
    %cst_87 = arith.constant 1.000000e+00 : f32
    %161 = vector.broadcast %cst_87 : f32 to vector<8x128xf32>
    %162 = arith.addf %161, %160 : vector<8x128xf32>
    %163 = arith.divf %161, %162 : vector<8x128xf32>
    %164 = math.tanh %158 : vector<8x128xf32>
    %c96_i32_88 = arith.constant 96 : i32
    %165 = tpu.dynamic_rotate %163 by %c96_i32_88 dim 1 : vector<8x128xf32>, i32 -> vector<8x128xf32>
    %c64_i32_89 = arith.constant 64 : i32
    %166 = tpu.dynamic_rotate %164 by %c64_i32_89 dim 1 : vector<8x128xf32>, i32 -> vector<8x128xf32>
    %c32_i32_90 = arith.constant 32 : i32
    %167 = tpu.dynamic_rotate %163 by %c32_i32_90 dim 1 : vector<8x128xf32>, i32 -> vector<8x128xf32>
    %168 = arith.mulf %165, %147 : vector<8x128xf32>
    %169 = arith.mulf %163, %166 : vector<8x128xf32>
    %170 = arith.addf %168, %169 : vector<8x128xf32>
    %171 = math.tanh %170 : vector<8x128xf32>
    %172 = arith.mulf %167, %171 : vector<8x128xf32>
    %cst_91 = arith.constant dense<0.000000e+00> : vector<8x128xf32>
    %173 = tpu.matmul %172, %13, %cst_91 {dimension_numbers = #tpu.dot_dimension_numbers<[1], [0], [0], [1], [0, 0, 1, 1], [], []>} : vector<8x128xf32>, vector<128x128xf32>, vector<8x128xf32> -> vector<8x128xf32>
    %174 = arith.addf %173, %16 : vector<8x128xf32>
    %c6_92 = arith.constant 6 : index
    %c0_93 = arith.constant 0 : index
    %c0_94 = arith.constant 0 : index
    %175 = vector.load %arg13[%c6_92, %c0_93, %c0_94] : memref<8x8x128xf32, #tpu.memory_space<vmem>>, vector<1x8x128xf32>
    %176 = vector.shape_cast %175 : vector<1x8x128xf32> to vector<8x128xf32>
    %177 = vector.shape_cast %174 : vector<8x128xf32> to vector<1x8x128xf32>
    tpu.vector_store %arg13[%c6_92, %c0_93, %c0_94], %177 {strides = array<i32>} : memref<8x8x128xf32, #tpu.memory_space<vmem>>, vector<1x8x128xf32>,
    %c7 = arith.constant 7 : index
    %c0_95 = arith.constant 0 : index
    %c0_96 = arith.constant 0 : index
    %178 = vector.load %arg12[%c7, %c0_95, %c0_96] : memref<8x8x128xf32, #tpu.memory_space<vmem>>, vector<1x8x128xf32>
    %179 = vector.shape_cast %178 : vector<1x8x128xf32> to vector<8x128xf32>
    %cst_97 = arith.constant dense<0.000000e+00> : vector<8x128xf32>
    %180 = tpu.matmul %172, %8, %cst_97 {dimension_numbers = #tpu.dot_dimension_numbers<[1], [0], [0], [1], [0, 0, 1, 1], [], []>} : vector<8x128xf32>, vector<128x128xf32>, vector<8x128xf32> -> vector<8x128xf32>
    %181 = arith.addf %179, %180 : vector<8x128xf32>
    %182 = arith.negf %181 : vector<8x128xf32>
    %183 = math.exp %182 : vector<8x128xf32>
    %cst_98 = arith.constant 1.000000e+00 : f32
    %184 = vector.broadcast %cst_98 : f32 to vector<8x128xf32>
    %185 = arith.addf %184, %183 : vector<8x128xf32>
    %186 = arith.divf %184, %185 : vector<8x128xf32>
    %187 = math.tanh %181 : vector<8x128xf32>
    %c96_i32_99 = arith.constant 96 : i32
    %188 = tpu.dynamic_rotate %186 by %c96_i32_99 dim 1 : vector<8x128xf32>, i32 -> vector<8x128xf32>
    %c64_i32_100 = arith.constant 64 : i32
    %189 = tpu.dynamic_rotate %187 by %c64_i32_100 dim 1 : vector<8x128xf32>, i32 -> vector<8x128xf32>
    %c32_i32_101 = arith.constant 32 : i32
    %190 = tpu.dynamic_rotate %186 by %c32_i32_101 dim 1 : vector<8x128xf32>, i32 -> vector<8x128xf32>
    %191 = arith.mulf %188, %170 : vector<8x128xf32>
    %192 = arith.mulf %186, %189 : vector<8x128xf32>
    %193 = arith.addf %191, %192 : vector<8x128xf32>
    %194 = math.tanh %193 : vector<8x128xf32>
    %195 = arith.mulf %190, %194 : vector<8x128xf32>
    %cst_102 = arith.constant dense<0.000000e+00> : vector<8x128xf32>
    %196 = tpu.matmul %195, %13, %cst_102 {dimension_numbers = #tpu.dot_dimension_numbers<[1], [0], [0], [1], [0, 0, 1, 1], [], []>} : vector<8x128xf32>, vector<128x128xf32>, vector<8x128xf32> -> vector<8x128xf32>
    %197 = arith.addf %196, %16 : vector<8x128xf32>
    %c7_103 = arith.constant 7 : index
    %c0_104 = arith.constant 0 : index
    %c0_105 = arith.constant 0 : index
    %198 = vector.load %arg13[%c7_103, %c0_104, %c0_105] : memref<8x8x128xf32, #tpu.memory_space<vmem>>, vector<1x8x128xf32>
    %199 = vector.shape_cast %198 : vector<1x8x128xf32> to vector<8x128xf32>
    %200 = vector.shape_cast %197 : vector<8x128xf32> to vector<1x8x128xf32>
    tpu.vector_store %arg13[%c7_103, %c0_104, %c0_105], %200 {strides = array<i32>} : memref<8x8x128xf32, #tpu.memory_space<vmem>>, vector<1x8x128xf32>,
    %c0_106 = arith.constant 0 : index
    %c0_107 = arith.constant 0 : index
    %201 = vector.load %arg7[%c0_106, %c0_107] : memref<128x128xf32, #tpu.memory_space<vmem>>, vector<128x128xf32>
    %c1_108 = arith.constant 1 : index
    %c0_109 = arith.constant 0 : index
    %c0_110 = arith.constant 0 : index
    %202 = vector.load %arg1[%c1_108, %c0_109, %c0_110] : memref<2x8x128xf32, #tpu.memory_space<vmem>>, vector<1x8x128xf32>
    %203 = vector.shape_cast %202 : vector<1x8x128xf32> to vector<8x128xf32>
    %c1_111 = arith.constant 1 : index
    %c0_112 = arith.constant 0 : index
    %c0_113 = arith.constant 0 : index
    %204 = vector.load %arg2[%c1_111, %c0_112, %c0_113] : memref<2x8x128xf32, #tpu.memory_space<vmem>>, vector<1x8x128xf32>
    %205 = vector.shape_cast %204 : vector<1x8x128xf32> to vector<8x128xf32>
    %c0_114 = arith.constant 0 : index
    %c0_115 = arith.constant 0 : index
    %c0_116 = arith.constant 0 : index
    %206 = vector.load %arg13[%c0_114, %c0_115, %c0_116] : memref<8x8x128xf32, #tpu.memory_space<vmem>>, vector<1x8x128xf32>
    %207 = vector.shape_cast %206 : vector<1x8x128xf32> to vector<8x128xf32>
    %cst_117 = arith.constant dense<0.000000e+00> : vector<8x128xf32>
    %208 = tpu.matmul %203, %201, %cst_117 {dimension_numbers = #tpu.dot_dimension_numbers<[1], [0], [0], [1], [0, 0, 1, 1], [], []>} : vector<8x128xf32>, vector<128x128xf32>, vector<8x128xf32> -> vector<8x128xf32>
    %209 = arith.addf %207, %208 : vector<8x128xf32>
    %210 = arith.negf %209 : vector<8x128xf32>
    %211 = math.exp %210 : vector<8x128xf32>
    %cst_118 = arith.constant 1.000000e+00 : f32
    %212 = vector.broadcast %cst_118 : f32 to vector<8x128xf32>
    %213 = arith.addf %212, %211 : vector<8x128xf32>
    %214 = arith.divf %212, %213 : vector<8x128xf32>
    %215 = math.tanh %209 : vector<8x128xf32>
    %c96_i32_119 = arith.constant 96 : i32
    %216 = tpu.dynamic_rotate %214 by %c96_i32_119 dim 1 : vector<8x128xf32>, i32 -> vector<8x128xf32>
    %c64_i32_120 = arith.constant 64 : i32
    %217 = tpu.dynamic_rotate %215 by %c64_i32_120 dim 1 : vector<8x128xf32>, i32 -> vector<8x128xf32>
    %c32_i32_121 = arith.constant 32 : i32
    %218 = tpu.dynamic_rotate %214 by %c32_i32_121 dim 1 : vector<8x128xf32>, i32 -> vector<8x128xf32>
    %219 = arith.mulf %216, %205 : vector<8x128xf32>
    %220 = arith.mulf %214, %217 : vector<8x128xf32>
    %221 = arith.addf %219, %220 : vector<8x128xf32>
    %222 = math.tanh %221 : vector<8x128xf32>
    %223 = arith.mulf %218, %222 : vector<8x128xf32>
    %c1_122 = arith.constant 1 : index
    %c0_123 = arith.constant 0 : index
    %c0_124 = arith.constant 0 : index
    %224 = vector.load %arg13[%c1_122, %c0_123, %c0_124] : memref<8x8x128xf32, #tpu.memory_space<vmem>>, vector<1x8x128xf32>
    %225 = vector.shape_cast %224 : vector<1x8x128xf32> to vector<8x128xf32>
    %cst_125 = arith.constant dense<0.000000e+00> : vector<8x128xf32>
    %226 = tpu.matmul %223, %201, %cst_125 {dimension_numbers = #tpu.dot_dimension_numbers<[1], [0], [0], [1], [0, 0, 1, 1], [], []>} : vector<8x128xf32>, vector<128x128xf32>, vector<8x128xf32> -> vector<8x128xf32>
    %227 = arith.addf %225, %226 : vector<8x128xf32>
    %228 = arith.negf %227 : vector<8x128xf32>
    %229 = math.exp %228 : vector<8x128xf32>
    %cst_126 = arith.constant 1.000000e+00 : f32
    %230 = vector.broadcast %cst_126 : f32 to vector<8x128xf32>
    %231 = arith.addf %230, %229 : vector<8x128xf32>
    %232 = arith.divf %230, %231 : vector<8x128xf32>
    %233 = math.tanh %227 : vector<8x128xf32>
    %c96_i32_127 = arith.constant 96 : i32
    %234 = tpu.dynamic_rotate %232 by %c96_i32_127 dim 1 : vector<8x128xf32>, i32 -> vector<8x128xf32>
    %c64_i32_128 = arith.constant 64 : i32
    %235 = tpu.dynamic_rotate %233 by %c64_i32_128 dim 1 : vector<8x128xf32>, i32 -> vector<8x128xf32>
    %c32_i32_129 = arith.constant 32 : i32
    %236 = tpu.dynamic_rotate %232 by %c32_i32_129 dim 1 : vector<8x128xf32>, i32 -> vector<8x128xf32>
    %237 = arith.mulf %234, %221 : vector<8x128xf32>
    %238 = arith.mulf %232, %235 : vector<8x128xf32>
    %239 = arith.addf %237, %238 : vector<8x128xf32>
    %240 = math.tanh %239 : vector<8x128xf32>
    %241 = arith.mulf %236, %240 : vector<8x128xf32>
    %c2_130 = arith.constant 2 : index
    %c0_131 = arith.constant 0 : index
    %c0_132 = arith.constant 0 : index
    %242 = vector.load %arg13[%c2_130, %c0_131, %c0_132] : memref<8x8x128xf32, #tpu.memory_space<vmem>>, vector<1x8x128xf32>
    %243 = vector.shape_cast %242 : vector<1x8x128xf32> to vector<8x128xf32>
    %cst_133 = arith.constant dense<0.000000e+00> : vector<8x128xf32>
    %244 = tpu.matmul %241, %201, %cst_133 {dimension_numbers = #tpu.dot_dimension_numbers<[1], [0], [0], [1], [0, 0, 1, 1], [], []>} : vector<8x128xf32>, vector<128x128xf32>, vector<8x128xf32> -> vector<8x128xf32>
    %245 = arith.addf %243, %244 : vector<8x128xf32>
    %246 = arith.negf %245 : vector<8x128xf32>
    %247 = math.exp %246 : vector<8x128xf32>
    %cst_134 = arith.constant 1.000000e+00 : f32
    %248 = vector.broadcast %cst_134 : f32 to vector<8x128xf32>
    %249 = arith.addf %248, %247 : vector<8x128xf32>
    %250 = arith.divf %248, %249 : vector<8x128xf32>
    %251 = math.tanh %245 : vector<8x128xf32>
    %c96_i32_135 = arith.constant 96 : i32
    %252 = tpu.dynamic_rotate %250 by %c96_i32_135 dim 1 : vector<8x128xf32>, i32 -> vector<8x128xf32>
    %c64_i32_136 = arith.constant 64 : i32
    %253 = tpu.dynamic_rotate %251 by %c64_i32_136 dim 1 : vector<8x128xf32>, i32 -> vector<8x128xf32>
    %c32_i32_137 = arith.constant 32 : i32
    %254 = tpu.dynamic_rotate %250 by %c32_i32_137 dim 1 : vector<8x128xf32>, i32 -> vector<8x128xf32>
    %255 = arith.mulf %252, %239 : vector<8x128xf32>
    %256 = arith.mulf %250, %253 : vector<8x128xf32>
    %257 = arith.addf %255, %256 : vector<8x128xf32>
    %258 = math.tanh %257 : vector<8x128xf32>
    %259 = arith.mulf %254, %258 : vector<8x128xf32>
    %c3_138 = arith.constant 3 : index
    %c0_139 = arith.constant 0 : index
    %c0_140 = arith.constant 0 : index
    %260 = vector.load %arg13[%c3_138, %c0_139, %c0_140] : memref<8x8x128xf32, #tpu.memory_space<vmem>>, vector<1x8x128xf32>
    %261 = vector.shape_cast %260 : vector<1x8x128xf32> to vector<8x128xf32>
    %cst_141 = arith.constant dense<0.000000e+00> : vector<8x128xf32>
    %262 = tpu.matmul %259, %201, %cst_141 {dimension_numbers = #tpu.dot_dimension_numbers<[1], [0], [0], [1], [0, 0, 1, 1], [], []>} : vector<8x128xf32>, vector<128x128xf32>, vector<8x128xf32> -> vector<8x128xf32>
    %263 = arith.addf %261, %262 : vector<8x128xf32>
    %264 = arith.negf %263 : vector<8x128xf32>
    %265 = math.exp %264 : vector<8x128xf32>
    %cst_142 = arith.constant 1.000000e+00 : f32
    %266 = vector.broadcast %cst_142 : f32 to vector<8x128xf32>
    %267 = arith.addf %266, %265 : vector<8x128xf32>
    %268 = arith.divf %266, %267 : vector<8x128xf32>
    %269 = math.tanh %263 : vector<8x128xf32>
    %c96_i32_143 = arith.constant 96 : i32
    %270 = tpu.dynamic_rotate %268 by %c96_i32_143 dim 1 : vector<8x128xf32>, i32 -> vector<8x128xf32>
    %c64_i32_144 = arith.constant 64 : i32
    %271 = tpu.dynamic_rotate %269 by %c64_i32_144 dim 1 : vector<8x128xf32>, i32 -> vector<8x128xf32>
    %c32_i32_145 = arith.constant 32 : i32
    %272 = tpu.dynamic_rotate %268 by %c32_i32_145 dim 1 : vector<8x128xf32>, i32 -> vector<8x128xf32>
    %273 = arith.mulf %270, %257 : vector<8x128xf32>
    %274 = arith.mulf %268, %271 : vector<8x128xf32>
    %275 = arith.addf %273, %274 : vector<8x128xf32>
    %276 = math.tanh %275 : vector<8x128xf32>
    %277 = arith.mulf %272, %276 : vector<8x128xf32>
    %c4_146 = arith.constant 4 : index
    %c0_147 = arith.constant 0 : index
    %c0_148 = arith.constant 0 : index
    %278 = vector.load %arg13[%c4_146, %c0_147, %c0_148] : memref<8x8x128xf32, #tpu.memory_space<vmem>>, vector<1x8x128xf32>
    %279 = vector.shape_cast %278 : vector<1x8x128xf32> to vector<8x128xf32>
    %cst_149 = arith.constant dense<0.000000e+00> : vector<8x128xf32>
    %280 = tpu.matmul %277, %201, %cst_149 {dimension_numbers = #tpu.dot_dimension_numbers<[1], [0], [0], [1], [0, 0, 1, 1], [], []>} : vector<8x128xf32>, vector<128x128xf32>, vector<8x128xf32> -> vector<8x128xf32>
    %281 = arith.addf %279, %280 : vector<8x128xf32>
    %282 = arith.negf %281 : vector<8x128xf32>
    %283 = math.exp %282 : vector<8x128xf32>
    %cst_150 = arith.constant 1.000000e+00 : f32
    %284 = vector.broadcast %cst_150 : f32 to vector<8x128xf32>
    %285 = arith.addf %284, %283 : vector<8x128xf32>
    %286 = arith.divf %284, %285 : vector<8x128xf32>
    %287 = math.tanh %281 : vector<8x128xf32>
    %c96_i32_151 = arith.constant 96 : i32
    %288 = tpu.dynamic_rotate %286 by %c96_i32_151 dim 1 : vector<8x128xf32>, i32 -> vector<8x128xf32>
    %c64_i32_152 = arith.constant 64 : i32
    %289 = tpu.dynamic_rotate %287 by %c64_i32_152 dim 1 : vector<8x128xf32>, i32 -> vector<8x128xf32>
    %c32_i32_153 = arith.constant 32 : i32
    %290 = tpu.dynamic_rotate %286 by %c32_i32_153 dim 1 : vector<8x128xf32>, i32 -> vector<8x128xf32>
    %291 = arith.mulf %288, %275 : vector<8x128xf32>
    %292 = arith.mulf %286, %289 : vector<8x128xf32>
    %293 = arith.addf %291, %292 : vector<8x128xf32>
    %294 = math.tanh %293 : vector<8x128xf32>
    %295 = arith.mulf %290, %294 : vector<8x128xf32>
    %c5_154 = arith.constant 5 : index
    %c0_155 = arith.constant 0 : index
    %c0_156 = arith.constant 0 : index
    %296 = vector.load %arg13[%c5_154, %c0_155, %c0_156] : memref<8x8x128xf32, #tpu.memory_space<vmem>>, vector<1x8x128xf32>
    %297 = vector.shape_cast %296 : vector<1x8x128xf32> to vector<8x128xf32>
    %cst_157 = arith.constant dense<0.000000e+00> : vector<8x128xf32>
    %298 = tpu.matmul %295, %201, %cst_157 {dimension_numbers = #tpu.dot_dimension_numbers<[1], [0], [0], [1], [0, 0, 1, 1], [], []>} : vector<8x128xf32>, vector<128x128xf32>, vector<8x128xf32> -> vector<8x128xf32>
    %299 = arith.addf %297, %298 : vector<8x128xf32>
    %300 = arith.negf %299 : vector<8x128xf32>
    %301 = math.exp %300 : vector<8x128xf32>
    %cst_158 = arith.constant 1.000000e+00 : f32
    %302 = vector.broadcast %cst_158 : f32 to vector<8x128xf32>
    %303 = arith.addf %302, %301 : vector<8x128xf32>
    %304 = arith.divf %302, %303 : vector<8x128xf32>
    %305 = math.tanh %299 : vector<8x128xf32>
    %c96_i32_159 = arith.constant 96 : i32
    %306 = tpu.dynamic_rotate %304 by %c96_i32_159 dim 1 : vector<8x128xf32>, i32 -> vector<8x128xf32>
    %c64_i32_160 = arith.constant 64 : i32
    %307 = tpu.dynamic_rotate %305 by %c64_i32_160 dim 1 : vector<8x128xf32>, i32 -> vector<8x128xf32>
    %c32_i32_161 = arith.constant 32 : i32
    %308 = tpu.dynamic_rotate %304 by %c32_i32_161 dim 1 : vector<8x128xf32>, i32 -> vector<8x128xf32>
    %309 = arith.mulf %306, %293 : vector<8x128xf32>
    %310 = arith.mulf %304, %307 : vector<8x128xf32>
    %311 = arith.addf %309, %310 : vector<8x128xf32>
    %312 = math.tanh %311 : vector<8x128xf32>
    %313 = arith.mulf %308, %312 : vector<8x128xf32>
    %c6_162 = arith.constant 6 : index
    %c0_163 = arith.constant 0 : index
    %c0_164 = arith.constant 0 : index
    %314 = vector.load %arg13[%c6_162, %c0_163, %c0_164] : memref<8x8x128xf32, #tpu.memory_space<vmem>>, vector<1x8x128xf32>
    %315 = vector.shape_cast %314 : vector<1x8x128xf32> to vector<8x128xf32>
    %cst_165 = arith.constant dense<0.000000e+00> : vector<8x128xf32>
    %316 = tpu.matmul %313, %201, %cst_165 {dimension_numbers = #tpu.dot_dimension_numbers<[1], [0], [0], [1], [0, 0, 1, 1], [], []>} : vector<8x128xf32>, vector<128x128xf32>, vector<8x128xf32> -> vector<8x128xf32>
    %317 = arith.addf %315, %316 : vector<8x128xf32>
    %318 = arith.negf %317 : vector<8x128xf32>
    %319 = math.exp %318 : vector<8x128xf32>
    %cst_166 = arith.constant 1.000000e+00 : f32
    %320 = vector.broadcast %cst_166 : f32 to vector<8x128xf32>
    %321 = arith.addf %320, %319 : vector<8x128xf32>
    %322 = arith.divf %320, %321 : vector<8x128xf32>
    %323 = math.tanh %317 : vector<8x128xf32>
    %c96_i32_167 = arith.constant 96 : i32
    %324 = tpu.dynamic_rotate %322 by %c96_i32_167 dim 1 : vector<8x128xf32>, i32 -> vector<8x128xf32>
    %c64_i32_168 = arith.constant 64 : i32
    %325 = tpu.dynamic_rotate %323 by %c64_i32_168 dim 1 : vector<8x128xf32>, i32 -> vector<8x128xf32>
    %c32_i32_169 = arith.constant 32 : i32
    %326 = tpu.dynamic_rotate %322 by %c32_i32_169 dim 1 : vector<8x128xf32>, i32 -> vector<8x128xf32>
    %327 = arith.mulf %324, %311 : vector<8x128xf32>
    %328 = arith.mulf %322, %325 : vector<8x128xf32>
    %329 = arith.addf %327, %328 : vector<8x128xf32>
    %330 = math.tanh %329 : vector<8x128xf32>
    %331 = arith.mulf %326, %330 : vector<8x128xf32>
    %c7_170 = arith.constant 7 : index
    %c0_171 = arith.constant 0 : index
    %c0_172 = arith.constant 0 : index
    %332 = vector.load %arg13[%c7_170, %c0_171, %c0_172] : memref<8x8x128xf32, #tpu.memory_space<vmem>>, vector<1x8x128xf32>
    %333 = vector.shape_cast %332 : vector<1x8x128xf32> to vector<8x128xf32>
    %cst_173 = arith.constant dense<0.000000e+00> : vector<8x128xf32>
    %334 = tpu.matmul %331, %201, %cst_173 {dimension_numbers = #tpu.dot_dimension_numbers<[1], [0], [0], [1], [0, 0, 1, 1], [], []>} : vector<8x128xf32>, vector<128x128xf32>, vector<8x128xf32> -> vector<8x128xf32>
    %335 = arith.addf %333, %334 : vector<8x128xf32>
    %336 = arith.negf %335 : vector<8x128xf32>
    %337 = math.exp %336 : vector<8x128xf32>
    %cst_174 = arith.constant 1.000000e+00 : f32
    %338 = vector.broadcast %cst_174 : f32 to vector<8x128xf32>
    %339 = arith.addf %338, %337 : vector<8x128xf32>
    %340 = arith.divf %338, %339 : vector<8x128xf32>
    %341 = math.tanh %335 : vector<8x128xf32>
    %c96_i32_175 = arith.constant 96 : i32
    %342 = tpu.dynamic_rotate %340 by %c96_i32_175 dim 1 : vector<8x128xf32>, i32 -> vector<8x128xf32>
    %c64_i32_176 = arith.constant 64 : i32
    %343 = tpu.dynamic_rotate %341 by %c64_i32_176 dim 1 : vector<8x128xf32>, i32 -> vector<8x128xf32>
    %c32_i32_177 = arith.constant 32 : i32
    %344 = tpu.dynamic_rotate %340 by %c32_i32_177 dim 1 : vector<8x128xf32>, i32 -> vector<8x128xf32>
    %345 = arith.mulf %342, %329 : vector<8x128xf32>
    %346 = arith.mulf %340, %343 : vector<8x128xf32>
    %347 = arith.addf %345, %346 : vector<8x128xf32>
    %348 = math.tanh %347 : vector<8x128xf32>
    %349 = arith.mulf %344, %348 : vector<8x128xf32>
    %c0_178 = arith.constant 0 : index
    %c0_179 = arith.constant 0 : index
    %350 = vector.load %arg9[%c0_178, %c0_179] : memref<128x128xf32, #tpu.memory_space<vmem>>, vector<128x128xf32>
    %cst_180 = arith.constant dense<0.000000e+00> : vector<8x128xf32>
    %351 = tpu.matmul %349, %350, %cst_180 {dimension_numbers = #tpu.dot_dimension_numbers<[1], [0], [0], [1], [0, 0, 1, 1], [], []>} : vector<8x128xf32>, vector<128x128xf32>, vector<8x128xf32> -> vector<8x128xf32>
    %c0_181 = arith.constant 0 : index
    %c0_182 = arith.constant 0 : index
    %352 = vector.load %arg10[%c0_181, %c0_182] : memref<1x128xf32, #tpu.memory_space<vmem>>, vector<1x128xf32>
    %353 = vector.broadcast %352 : vector<1x128xf32> to vector<8x128xf32>
    %354 = arith.addf %351, %353 : vector<8x128xf32>
    %c0_183 = arith.constant 0 : index
    %c0_184 = arith.constant 0 : index
    %355 = vector.load %arg11[%c0_183, %c0_184] : memref<8x128xf32, #tpu.memory_space<vmem>>, vector<8x128xf32>
    tpu.vector_store %arg11[%c0_183, %c0_184], %354 {strides = array<i32>} : memref<8x128xf32, #tpu.memory_space<vmem>>, vector<8x128xf32>,
    return
  }
}

</mosaic_0001>

<llo_original>
// kernel: tpu_custom_call.1
$region0: #{tpu_custom_call.1}
  #allocation0 [shape = 'u32[]', space=smem, size = 0x4, offset = 0x4, fixed_abs, tag = 'smem constant byte address 0x4 - core index']
  #allocation1 [shape = 'u32[72,128]{1,0:T(1,128)}', space=vmem, size = 0x9000, scoped, tag = 'internal scratch']
  #allocation2 [shape = 'f32[8,8,128]{2,1,0:T(8,128)}', space=vmem, size = 0x8000, scoped, tag = 'scratch operand']
  #allocation3 [shape = 'f32[8,8,128]{2,1,0:T(8,128)}', space=vmem, size = 0x8000, scoped, tag = 'scratch operand']
  %s0 = inlined_call_operand.hbm [shape: f32[64,128], index: 0, kind: input, shape index: {}]
  %s1 = inlined_call_operand.hbm [shape: f32[2,8,128], index: 1, kind: input, shape index: {}]
  %s2 = inlined_call_operand.hbm [shape: f32[2,8,128], index: 2, kind: input, shape index: {}]
  %s3 = inlined_call_operand.hbm [shape: f32[128,128], index: 3, kind: input, shape index: {}]
  %s4 = inlined_call_operand.hbm [shape: f32[128,128], index: 4, kind: input, shape index: {}]
  %s5 = inlined_call_operand.vmem [shape: f32[1,128], index: 5, kind: input, shape index: {}]
  %s6 = inlined_call_operand.hbm [shape: f32[128,128], index: 6, kind: input, shape index: {}]
  %s7 = inlined_call_operand.hbm [shape: f32[128,128], index: 7, kind: input, shape index: {}]
  %s8 = inlined_call_operand.vmem [shape: f32[1,128], index: 8, kind: input, shape index: {}]
  %s9 = inlined_call_operand.hbm [shape: f32[128,128], index: 9, kind: input, shape index: {}]
  %s10 = inlined_call_operand.vmem [shape: f32[1,128], index: 10, kind: input, shape index: {}]
  %s11 = inlined_call_operand.hbm [shape: f32[8,128], index: 11, kind: output, shape index: {}]
  %s12 = sld [smem:[#allocation0]]
  $region86: #{tpu_custom_call.1} parent=0
    _
  %s14 = ssub.s32 1, %s12
  %s15 = scalar_select 0, %s14, %s12
  $region1: #{tpu_custom_call.1} parent=0
    #allocation4 [shape = 'u8[32768]{0}', space=vmem, size = 0x8000, scoped, tag = 'input window, operand 0, single buffered']
    #allocation5 [shape = 's32[1]{0}', space=sflag, size = 0x4, scoped, tag = 'scoped memory for tpu_custom_call.1']
    #allocation6 [shape = 's32[1]{0}', space=sflag, size = 0x4, scoped, tag = 'scoped memory for tpu_custom_call.1']
    #allocation7 [shape = 'u8[8192]{0}', space=vmem, size = 0x2000, scoped, tag = 'input window, operand 1, single buffered']
    #allocation8 [shape = 's32[1]{0}', space=sflag, size = 0x4, scoped, tag = 'scoped memory for tpu_custom_call.1']
    #allocation9 [shape = 'u8[8192]{0}', space=vmem, size = 0x2000, scoped, tag = 'input window, operand 2, single buffered']
    #allocation10 [shape = 'u8[65536]{0}', space=vmem, size = 0x10000, scoped, tag = 'input window, operand 3, single buffered']
    #allocation11 [shape = 's32[1]{0}', space=sflag, size = 0x4, scoped, tag = 'scoped memory for tpu_custom_call.1']
    #allocation12 [shape = 'u8[65536]{0}', space=vmem, size = 0x10000, scoped, tag = 'input window, operand 4, single buffered']
    #allocation13 [shape = 'u8[65536]{0}', space=vmem, size = 0x10000, scoped, tag = 'input window, operand 6, single buffered']
    #allocation14 [shape = 's32[1]{0}', space=sflag, size = 0x4, scoped, tag = 'scoped memory for tpu_custom_call.1']
    #allocation15 [shape = 'u8[65536]{0}', space=vmem, size = 0x10000, scoped, tag = 'input window, operand 7, single buffered']
    #allocation16 [shape = 'u8[65536]{0}', space=vmem, size = 0x10000, scoped, tag = 'input window, operand 9, single buffered']
    #allocation17 [shape = 's32[1]{0}', space=sflag, size = 0x4, scoped, tag = 'scoped memory for tpu_custom_call.1']
    #allocation18 [shape = 'u8[4096]{0}', space=vmem, size = 0x1000, scoped, tag = 'output window, operand 0, single buffered']
    %16 = vsyncpa [#allocation5], 0
    %17 = vsyncpa [#allocation8], 0
    %18 = vsyncpa [#allocation11], 0
    %19 = vsyncpa [#allocation14], 0
    %20 = vsyncpa [#allocation17], 0
    %21 = vsyncpa [#allocation6], 0
    // Predicated region
    $region2: #{tpu_custom_call.1} parent=1 // pred_check
      _
    $region3: #{tpu_custom_call.1} parent=1 // pred_check_branch
      %23 = sbr.rel (0) target = $region5
    $region4: #{tpu_custom_call.1} parent=1 // pred_region
      %25 = vsyncadd [#allocation5], 0
      %s26 = sshll.u32 %s0, 4
      %s27 = int_to_ptr.hbm [resolvable:$true] %s26
      %s28 = sshll.u32 [#allocation4], 4
      %s29 = int_to_ptr.vmem [resolvable:$true] %s28
      %34 = dma.hbm_to_vmem [thread:$0]  %s27, 1024, %s29, [#allocation5], 128, 128, 8
    $region5: #{tpu_custom_call.1} parent=1 // pred_fallthru
      _
    // Predicated region
    $region6: #{tpu_custom_call.1} parent=1 // pred_check
      _
    $region7: #{tpu_custom_call.1} parent=1 // pred_check_branch
      %36 = sbr.rel (0) target = $region9
    $region8: #{tpu_custom_call.1} parent=1 // pred_region
      %38 = vsyncadd [#allocation8], 0
      %s39 = sshll.u32 %s1, 4
      %s40 = int_to_ptr.hbm [resolvable:$true] %s39
      %s41 = sshll.u32 [#allocation7], 4
      %s42 = int_to_ptr.vmem [resolvable:$true] %s41
      %47 = dma.hbm_to_vmem [thread:$0]  %s40, 256, %s42, [#allocation8], 128, 128, 8
    $region9: #{tpu_custom_call.1} parent=1 // pred_fallthru
      _
    // Predicated region
    $region10: #{tpu_custom_call.1} parent=1 // pred_check
      _
    $region11: #{tpu_custom_call.1} parent=1 // pred_check_branch
      %49 = sbr.rel (0) target = $region13
    $region12: #{tpu_custom_call.1} parent=1 // pred_region
      %51 = vsyncadd [#allocation8], 0
      %s52 = sshll.u32 %s2, 4
      %s53 = int_to_ptr.hbm [resolvable:$true] %s52
      %s54 = sshll.u32 [#allocation9], 4
      %s55 = int_to_ptr.vmem [resolvable:$true] %s54
      %60 = dma.hbm_to_vmem [thread:$0]  %s53, 256, %s55, [#allocation8], 128, 128, 8
    $region13: #{tpu_custom_call.1} parent=1 // pred_fallthru
      _
    // Predicated region
    $region14: #{tpu_custom_call.1} parent=1 // pred_check
      _
    $region15: #{tpu_custom_call.1} parent=1 // pred_check_branch
      %62 = sbr.rel (0) target = $region17
    $region16: #{tpu_custom_call.1} parent=1 // pred_region
      %64 = vsyncadd [#allocation11], 0
      %s65 = sshll.u32 %s3, 4
      %s66 = int_to_ptr.hbm [resolvable:$true] %s65
      %s67 = sshll.u32 [#allocation10], 4
      %s68 = int_to_ptr.vmem [resolvable:$true] %s67
      %73 = dma.hbm_to_vmem [thread:$0]  %s66, 2048, %s68, [#allocation11], 128, 128, 8
    $region17: #{tpu_custom_call.1} parent=1 // pred_fallthru
      _
    // Predicated region
    $region18: #{tpu_custom_call.1} parent=1 // pred_check
      _
    $region19: #{tpu_custom_call.1} parent=1 // pred_check_branch
      %75 = sbr.rel (0) target = $region21
    $region20: #{tpu_custom_call.1} parent=1 // pred_region
      %77 = vsyncadd [#allocation11], 0
      %s78 = sshll.u32 %s4, 4
      %s79 = int_to_ptr.hbm [resolvable:$true] %s78
      %s80 = sshll.u32 [#allocation12], 4
      %s81 = int_to_ptr.vmem [resolvable:$true] %s80
      %86 = dma.hbm_to_vmem [thread:$0]  %s79, 2048, %s81, [#allocation11], 128, 128, 8
    $region21: #{tpu_custom_call.1} parent=1 // pred_fallthru
      _
    // Predicated region
    $region22: #{tpu_custom_call.1} parent=1 // pred_check
      _
    $region23: #{tpu_custom_call.1} parent=1 // pred_check_branch
      %88 = sbr.rel (0) target = $region25
    $region24: #{tpu_custom_call.1} parent=1 // pred_region
      _
    $region25: #{tpu_custom_call.1} parent=1 // pred_fallthru
      _
    // Predicated region
    $region26: #{tpu_custom_call.1} parent=1 // pred_check
      _
    $region27: #{tpu_custom_call.1} parent=1 // pred_check_branch
      %90 = sbr.rel (0) target = $region29
    $region28: #{tpu_custom_call.1} parent=1 // pred_region
      %92 = vsyncadd [#allocation14], 0
      %s93 = sshll.u32 %s6, 4
      %s94 = int_to_ptr.hbm [resolvable:$true] %s93
      %s95 = sshll.u32 [#allocation13], 4
      %s96 = int_to_ptr.vmem [resolvable:$true] %s95
      %101 = dma.hbm_to_vmem [thread:$0]  %s94, 2048, %s96, [#allocation14], 128, 128, 8
    $region29: #{tpu_custom_call.1} parent=1 // pred_fallthru
      _
    // Predicated region
    $region30: #{tpu_custom_call.1} parent=1 // pred_check
      _
    $region31: #{tpu_custom_call.1} parent=1 // pred_check_branch
      %103 = sbr.rel (0) target = $region33
    $region32: #{tpu_custom_call.1} parent=1 // pred_region
      %105 = vsyncadd [#allocation14], 0
      %s106 = sshll.u32 %s7, 4
      %s107 = int_to_ptr.hbm [resolvable:$true] %s106
      %s108 = sshll.u32 [#allocation15], 4
      %s109 = int_to_ptr.vmem [resolvable:$true] %s108
      %114 = dma.hbm_to_vmem [thread:$0]  %s107, 2048, %s109, [#allocation14], 128, 128, 8
    $region33: #{tpu_custom_call.1} parent=1 // pred_fallthru
      _
    // Predicated region
    $region34: #{tpu_custom_call.1} parent=1 // pred_check
      _
    $region35: #{tpu_custom_call.1} parent=1 // pred_check_branch
      %116 = sbr.rel (0) target = $region37
    $region36: #{tpu_custom_call.1} parent=1 // pred_region
      _
    $region37: #{tpu_custom_call.1} parent=1 // pred_fallthru
      _
    // Predicated region
    $region38: #{tpu_custom_call.1} parent=1 // pred_check
      _
    $region39: #{tpu_custom_call.1} parent=1 // pred_check_branch
      %118 = sbr.rel (0) target = $region41
    $region40: #{tpu_custom_call.1} parent=1 // pred_region
      %120 = vsyncadd [#allocation17], 0
      %s121 = sshll.u32 %s9, 4
      %s122 = int_to_ptr.hbm [resolvable:$true] %s121
      %s123 = sshll.u32 [#allocation16], 4
      %s124 = int_to_ptr.vmem [resolvable:$true] %s123
      %129 = dma.hbm_to_vmem [thread:$0]  %s122, 2048, %s124, [#allocation17], 128, 128, 8
    $region41: #{tpu_custom_call.1} parent=1 // pred_fallthru
      _
    // Predicated region
    $region42: #{tpu_custom_call.1} parent=1 // pred_check
      _
    $region43: #{tpu_custom_call.1} parent=1 // pred_check_branch
      %131 = sbr.rel (0) target = $region45
    $region44: #{tpu_custom_call.1} parent=1 // pred_region
      _
    $region45: #{tpu_custom_call.1} parent=1 // pred_fallthru
      _
    // Predicated region
    $region46: #{tpu_custom_call.1} parent=1 // pred_check
      _
    $region47: #{tpu_custom_call.1} parent=1 // pred_check_branch
      %133 = sbr.rel (0) target = $region49
    $region48: #{tpu_custom_call.1} parent=1 // pred_region
      %135 = dma.done [#allocation5], 1024
    $region49: #{tpu_custom_call.1} parent=1 // pred_fallthru
      _
    // Predicated region
    $region50: #{tpu_custom_call.1} parent=1 // pred_check
      _
    $region51: #{tpu_custom_call.1} parent=1 // pred_check_branch
      %137 = sbr.rel (0) target = $region53
    $region52: #{tpu_custom_call.1} parent=1 // pred_region
      %139 = dma.done [#allocation8], 256
    $region53: #{tpu_custom_call.1} parent=1 // pred_fallthru
      _
    // Predicated region
    $region54: #{tpu_custom_call.1} parent=1 // pred_check
      _
    $region55: #{tpu_custom_call.1} parent=1 // pred_check_branch
      %141 = sbr.rel (0) target = $region57
    $region56: #{tpu_custom_call.1} parent=1 // pred_region
      %143 = dma.done [#allocation8], 256
    $region57: #{tpu_custom_call.1} parent=1 // pred_fallthru
      _
    // Predicated region
    $region58: #{tpu_custom_call.1} parent=1 // pred_check
      _
    $region59: #{tpu_custom_call.1} parent=1 // pred_check_branch
      %145 = sbr.rel (0) target = $region61
    $region60: #{tpu_custom_call.1} parent=1 // pred_region
      %147 = dma.done [#allocation11], 2048
    $region61: #{tpu_custom_call.1} parent=1 // pred_fallthru
      _
    // Predicated region
    $region62: #{tpu_custom_call.1} parent=1 // pred_check
      _
    $region63: #{tpu_custom_call.1} parent=1 // pred_check_branch
      %149 = sbr.rel (0) target = $region65
    $region64: #{tpu_custom_call.1} parent=1 // pred_region
      %151 = dma.done [#allocation11], 2048
    $region65: #{tpu_custom_call.1} parent=1 // pred_fallthru
      _
    // Predicated region
    $region66: #{tpu_custom_call.1} parent=1 // pred_check
      _
    $region67: #{tpu_custom_call.1} parent=1 // pred_check_branch
      %153 = sbr.rel (0) target = $region69
    $region68: #{tpu_custom_call.1} parent=1 // pred_region
      %155 = dma.done [#allocation14], 2048
    $region69: #{tpu_custom_call.1} parent=1 // pred_fallthru
      _
    // Predicated region
    $region70: #{tpu_custom_call.1} parent=1 // pred_check
      _
    $region71: #{tpu_custom_call.1} parent=1 // pred_check_branch
      %157 = sbr.rel (0) target = $region73
    $region72: #{tpu_custom_call.1} parent=1 // pred_region
      %159 = dma.done [#allocation14], 2048
    $region73: #{tpu_custom_call.1} parent=1 // pred_fallthru
      _
    // Predicated region
    $region74: #{tpu_custom_call.1} parent=1 // pred_check
      _
    $region75: #{tpu_custom_call.1} parent=1 // pred_check_branch
      %161 = sbr.rel (0) target = $region77
    $region76: #{tpu_custom_call.1} parent=1 // pred_region
      %163 = dma.done [#allocation17], 2048
    $region77: #{tpu_custom_call.1} parent=1 // pred_fallthru
      _
    %v164 = vld [vmem:[#allocation4] sm:$0xff]
    %v165 = vld [vmem:[#allocation4 + $0x8] sm:$0xff]
    %v166 = vld [vmem:[#allocation4 + $0x10] sm:$0xff]
    %v167 = vld [vmem:[#allocation4 + $0x18] sm:$0xff]
    %v168 = vld [vmem:[#allocation4 + $0x20] sm:$0xff]
    %v169 = vld [vmem:[#allocation4 + $0x28] sm:$0xff]
    %v170 = vld [vmem:[#allocation4 + $0x30] sm:$0xff]
    %v171 = vld [vmem:[#allocation4 + $0x38] sm:$0xff]
    %v172 = vld [vmem:[#allocation10] sm:$0xff]
    %v173 = vld [vmem:[#allocation10 + $0x8] sm:$0xff]
    %v174 = vld [vmem:[#allocation10 + $0x10] sm:$0xff]
    %v175 = vld [vmem:[#allocation10 + $0x18] sm:$0xff]
    %v176 = vld [vmem:[#allocation10 + $0x20] sm:$0xff]
    %v177 = vld [vmem:[#allocation10 + $0x28] sm:$0xff]
    %v178 = vld [vmem:[#allocation10 + $0x30] sm:$0xff]
    %v179 = vld [vmem:[#allocation10 + $0x38] sm:$0xff]
    %v180 = vld [vmem:[#allocation10 + $0x40] sm:$0xff]
    %v181 = vld [vmem:[#allocation10 + $0x48] sm:$0xff]
    %v182 = vld [vmem:[#allocation10 + $0x50] sm:$0xff]
    %v183 = vld [vmem:[#allocation10 + $0x58] sm:$0xff]
    %v184 = vld [vmem:[#allocation10 + $0x60] sm:$0xff]
    %v185 = vld [vmem:[#allocation10 + $0x68] sm:$0xff]
    %v186 = vld [vmem:[#allocation10 + $0x70] sm:$0xff]
    %v187 = vld [vmem:[#allocation10 + $0x78] sm:$0xff]
    %v188 = vld [vmem:[%s5] sm:$0x1]
    %v190 = vperm.slane %v188, 0
    %192 = vmatpush.msra.mxu0 %v187
    %193 = vmatpush.msra.mxu0 %v186
    %194 = vmatpush.msra.mxu0 %v185
    %195 = vmatpush.msra.mxu0 %v184
    %196 = vmatpush.msra.mxu0 %v183
    %197 = vmatpush.msra.mxu0 %v182
    %198 = vmatpush.msra.mxu0 %v181
    %199 = vmatpush.msra.mxu0 %v180
    %200 = vmatpush.msra.mxu0 %v179
    %201 = vmatpush.msra.mxu0 %v178
    %202 = vmatpush.msra.mxu0 %v177
    %203 = vmatpush.msra.mxu0 %v176
    %204 = vmatpush.msra.mxu0 %v175
    %205 = vmatpush.msra.mxu0 %v174
    %206 = vmatpush.msra.mxu0 %v173
    %207 = vmatpush.msra.mxu0 %v172
    %208 = vmatmul.f32.gmra.mxu0 %v164
    %v209 = vpop.f32.mrf.mxu0
    %v210 = vadd.f32 %v190, %v209
    %211 = vmatmul.f32.gmra.mxu0 %v165
    %v212 = vpop.f32.mrf.mxu0
    %v213 = vadd.f32 %v190, %v212
    %214 = vmatmul.f32.gmra.mxu0 %v166
    %v215 = vpop.f32.mrf.mxu0
    %v216 = vadd.f32 %v190, %v215
    %217 = vmatmul.f32.gmra.mxu0 %v167
    %v218 = vpop.f32.mrf.mxu0
    %v219 = vadd.f32 %v190, %v218
    %220 = vmatmul.f32.gmra.mxu0 %v168
    %v221 = vpop.f32.mrf.mxu0
    %v222 = vadd.f32 %v190, %v221
    %223 = vmatmul.f32.gmra.mxu0 %v169
    %v224 = vpop.f32.mrf.mxu0
    %v225 = vadd.f32 %v190, %v224
    %226 = vmatmul.f32.gmra.mxu0 %v170
    %v227 = vpop.f32.mrf.mxu0
    %v228 = vadd.f32 %v190, %v227
    %229 = vmatmul.f32.gmra.mxu0 %v171
    %v230 = vpop.f32.mrf.mxu0
    %v231 = vadd.f32 %v190, %v230
    %232 = vdwg.mxu0
    %233 = vst [vmem:[#allocation2] sm:$0xff] %v210
    %234 = vst [vmem:[#allocation2 + $0x8] sm:$0xff] %v213
    %235 = vst [vmem:[#allocation2 + $0x10] sm:$0xff] %v216
    %236 = vst [vmem:[#allocation2 + $0x18] sm:$0xff] %v219
    %237 = vst [vmem:[#allocation2 + $0x20] sm:$0xff] %v222
    %238 = vst [vmem:[#allocation2 + $0x28] sm:$0xff] %v225
    %239 = vst [vmem:[#allocation2 + $0x30] sm:$0xff] %v228
    %240 = vst [vmem:[#allocation2 + $0x38] sm:$0xff] %v231
    %v241 = vld [vmem:[#allocation12] sm:$0xff]
    %v242 = vld [vmem:[#allocation12 + $0x8] sm:$0xff]
    %v243 = vld [vmem:[#allocation12 + $0x10] sm:$0xff]
    %v244 = vld [vmem:[#allocation12 + $0x18] sm:$0xff]
    %v245 = vld [vmem:[#allocation12 + $0x20] sm:$0xff]
    %v246 = vld [vmem:[#allocation12 + $0x28] sm:$0xff]
    %v247 = vld [vmem:[#allocation12 + $0x30] sm:$0xff]
    %v248 = vld [vmem:[#allocation12 + $0x38] sm:$0xff]
    %v249 = vld [vmem:[#allocation12 + $0x40] sm:$0xff]
    %v250 = vld [vmem:[#allocation12 + $0x48] sm:$0xff]
    %v251 = vld [vmem:[#allocation12 + $0x50] sm:$0xff]
    %v252 = vld [vmem:[#allocation12 + $0x58] sm:$0xff]
    %v253 = vld [vmem:[#allocation12 + $0x60] sm:$0xff]
    %v254 = vld [vmem:[#allocation12 + $0x68] sm:$0xff]
    %v255 = vld [vmem:[#allocation12 + $0x70] sm:$0xff]
    %v256 = vld [vmem:[#allocation12 + $0x78] sm:$0xff]
    %v257 = vld [vmem:[#allocation7] sm:$0xff]
    %v258 = vld [vmem:[#allocation9] sm:$0xff]
    %v259 = vld [vmem:[#allocation13] sm:$0xff]
    %v260 = vld [vmem:[#allocation13 + $0x8] sm:$0xff]
    %v261 = vld [vmem:[#allocation13 + $0x10] sm:$0xff]
    %v262 = vld [vmem:[#allocation13 + $0x18] sm:$0xff]
    %v263 = vld [vmem:[#allocation13 + $0x20] sm:$0xff]
    %v264 = vld [vmem:[#allocation13 + $0x28] sm:$0xff]
    %v265 = vld [vmem:[#allocation13 + $0x30] sm:$0xff]
    %v266 = vld [vmem:[#allocation13 + $0x38] sm:$0xff]
    %v267 = vld [vmem:[#allocation13 + $0x40] sm:$0xff]
    %v268 = vld [vmem:[#allocation13 + $0x48] sm:$0xff]
    %v269 = vld [vmem:[#allocation13 + $0x50] sm:$0xff]
    %v270 = vld [vmem:[#allocation13 + $0x58] sm:$0xff]
    %v271 = vld [vmem:[#allocation13 + $0x60] sm:$0xff]
    %v272 = vld [vmem:[#allocation13 + $0x68] sm:$0xff]
    %v273 = vld [vmem:[#allocation13 + $0x70] sm:$0xff]
    %v274 = vld [vmem:[#allocation13 + $0x78] sm:$0xff]
    %v275 = vld [vmem:[%s8] sm:$0x1]
    %v277 = vperm.slane %v275, 0
    %v279 = vld [vmem:[#allocation2] sm:$0xff]
    %280 = vmatpush.msra.mxu0 %v256
    %281 = vmatpush.msra.mxu0 %v255
    %282 = vmatpush.msra.mxu0 %v254
    %283 = vmatpush.msra.mxu0 %v253
    %284 = vmatpush.msra.mxu0 %v252
    %285 = vmatpush.msra.mxu0 %v251
    %286 = vmatpush.msra.mxu0 %v250
    %287 = vmatpush.msra.mxu0 %v249
    %288 = vmatpush.msra.mxu0 %v248
    %289 = vmatpush.msra.mxu0 %v247
    %290 = vmatpush.msra.mxu0 %v246
    %291 = vmatpush.msra.mxu0 %v245
    %292 = vmatpush.msra.mxu0 %v244
    %293 = vmatpush.msra.mxu0 %v243
    %294 = vmatpush.msra.mxu0 %v242
    %295 = vmatpush.msra.mxu0 %v241
    %296 = vmatmul.f32.gmra.mxu0 %v257
    %v297 = vpop.f32.mrf.mxu0
    %v298 = vadd.f32 0.0, %v297
    %299 = vdwg.mxu0
    %v300 = vadd.f32 %v279, %v298
    %v301 = vxor.u32 %v300, 2147483648
    %v302 = vmul.f32 %v301, 1.442695
    %v303 = vpow.pop %v302
    %v304 = vadd.f32 %v303, 1.0
    %v305 = vrcp.pop %v304
    %v306 = vmul.f32 %v304, %v305
    %v307 = vsub.f32 1.0, %v306
    %v308 = vmul.f32 %v305, %v307
    %v309 = vadd.f32 %v305, %v308
    %vm310 = vweird.f32 %v304
    %vm311 = vweird.f32 %v305
    %vm312 = vmor %vm310, %vm311
    %v313 = vsel %vm312, %v305, %v309
    %v314 = vand.u32 2147483647, %v304
    %vm315 = vcmp.eq.f32.partialorder %v314, 8.507059e+37
    %v316 = vand.u32 %v304, 2147483648
    %v317 = vor.u32 1.1754944e-38, %v316
    %v318 = vsel %vm315, %v317, %v313
    %v319 = vmul.f32 1.0, %v318
    %v320 = vtanh.pop %v300
    %321 = vrot.lane.b32.xlu0 %v319, 96
    %v322 = vpop.permute.xlu0 %321
    %323 = vrot.lane.b32.xlu0 %v320, 64
    %v324 = vpop.permute.xlu0 %323
    %325 = vrot.lane.b32.xlu0 %v319, 32
    %v326 = vpop.permute.xlu0 %325
    %v327 = vmul.f32 %v322, %v258
    %v328 = vmul.f32 %v319, %v324
    %v329 = vadd.f32 %v327, %v328
    %v330 = vtanh.pop %v329
    %v331 = vmul.f32 %v326, %v330
    %332 = vmatpush.msra.mxu0 %v274
    %333 = vmatpush.msra.mxu0 %v273
    %334 = vmatpush.msra.mxu0 %v272
    %335 = vmatpush.msra.mxu0 %v271
    %336 = vmatpush.msra.mxu0 %v270
    %337 = vmatpush.msra.mxu0 %v269
    %338 = vmatpush.msra.mxu0 %v268
    %339 = vmatpush.msra.mxu0 %v267
    %340 = vmatpush.msra.mxu0 %v266
    %341 = vmatpush.msra.mxu0 %v265
    %342 = vmatpush.msra.mxu0 %v264
    %343 = vmatpush.msra.mxu0 %v263
    %344 = vmatpush.msra.mxu0 %v262
    %345 = vmatpush.msra.mxu0 %v261
    %346 = vmatpush.msra.mxu0 %v260
    %347 = vmatpush.msra.mxu0 %v259
    %348 = vmatmul.f32.gmra.mxu0 %v331
    %v349 = vpop.f32.mrf.mxu0
    %v350 = vadd.f32 %v277, %v349
    %351 = vdwg.mxu0
    %352 = vst [vmem:[#allocation3] sm:$0xff] %v350
    %s353 = scalar_lea.vmem [#allocation2], 8
    %v354 = vld [vmem:[%s353] sm:$0xff]
    %355 = vmatpush.msra.mxu0 %v256
    %356 = vmatpush.msra.mxu0 %v255
    %357 = vmatpush.msra.mxu0 %v254
    %358 = vmatpush.msra.mxu0 %v253
    %359 = vmatpush.msra.mxu0 %v252
    %360 = vmatpush.msra.mxu0 %v251
    %361 = vmatpush.msra.mxu0 %v250
    %362 = vmatpush.msra.mxu0 %v249
    %363 = vmatpush.msra.mxu0 %v248
    %364 = vmatpush.msra.mxu0 %v247
    %365 = vmatpush.msra.mxu0 %v246
    %366 = vmatpush.msra.mxu0 %v245
    %367 = vmatpush.msra.mxu0 %v244
    %368 = vmatpush.msra.mxu0 %v243
    %369 = vmatpush.msra.mxu0 %v242
    %370 = vmatpush.msra.mxu0 %v241
    %371 = vmatmul.f32.gmra.mxu0 %v331
    %v372 = vpop.f32.mrf.mxu0
    %v373 = vadd.f32 0.0, %v372
    %374 = vdwg.mxu0
    %v375 = vadd.f32 %v354, %v373
    %v376 = vxor.u32 %v375, 2147483648
    %v377 = vmul.f32 %v376, 1.442695
    %v378 = vpow.pop %v377
    %v379 = vadd.f32 %v378, 1.0
    %v380 = vrcp.pop %v379
    %v381 = vmul.f32 %v379, %v380
    %v382 = vsub.f32 1.0, %v381
    %v383 = vmul.f32 %v380, %v382
    %v384 = vadd.f32 %v380, %v383
    %vm385 = vweird.f32 %v379
    %vm386 = vweird.f32 %v380
    %vm387 = vmor %vm385, %vm386
    %v388 = vsel %vm387, %v380, %v384
    %v389 = vand.u32 2147483647, %v379
    %vm390 = vcmp.eq.f32.partialorder %v389, 8.507059e+37
    %v391 = vand.u32 %v379, 2147483648
    %v392 = vor.u32 1.1754944e-38, %v391
    %v393 = vsel %vm390, %v392, %v388
    %v394 = vmul.f32 1.0, %v393
    %v395 = vtanh.pop %v375
    %396 = vrot.lane.b32.xlu0 %v394, 96
    %v397 = vpop.permute.xlu0 %396
    %398 = vrot.lane.b32.xlu0 %v395, 64
    %v399 = vpop.permute.xlu0 %398
    %400 = vrot.lane.b32.xlu0 %v394, 32
    %v401 = vpop.permute.xlu0 %400
    %v402 = vmul.f32 %v397, %v329
    %v403 = vmul.f32 %v394, %v399
    %v404 = vadd.f32 %v402, %v403
    %v405 = vtanh.pop %v404
    %v406 = vmul.f32 %v401, %v405
    %407 = vmatpush.msra.mxu0 %v274
    %408 = vmatpush.msra.mxu0 %v273
    %409 = vmatpush.msra.mxu0 %v272
    %410 = vmatpush.msra.mxu0 %v271
    %411 = vmatpush.msra.mxu0 %v270
    %412 = vmatpush.msra.mxu0 %v269
    %413 = vmatpush.msra.mxu0 %v268
    %414 = vmatpush.msra.mxu0 %v267
    %415 = vmatpush.msra.mxu0 %v266
    %416 = vmatpush.msra.mxu0 %v265
    %417 = vmatpush.msra.mxu0 %v264
    %418 = vmatpush.msra.mxu0 %v263
    %419 = vmatpush.msra.mxu0 %v262
    %420 = vmatpush.msra.mxu0 %v261
    %421 = vmatpush.msra.mxu0 %v260
    %422 = vmatpush.msra.mxu0 %v259
    %423 = vmatmul.f32.gmra.mxu0 %v406
    %v424 = vpop.f32.mrf.mxu0
    %v425 = vadd.f32 %v277, %v424
    %426 = vdwg.mxu0
    %s427 = scalar_lea.vmem [#allocation3], 8
    %428 = vst [vmem:[%s427] sm:$0xff] %v425
    %s429 = scalar_lea.vmem [#allocation2], 16
    %v430 = vld [vmem:[%s429] sm:$0xff]
    %431 = vmatpush.msra.mxu0 %v256
    %432 = vmatpush.msra.mxu0 %v255
    %433 = vmatpush.msra.mxu0 %v254
    %434 = vmatpush.msra.mxu0 %v253
    %435 = vmatpush.msra.mxu0 %v252
    %436 = vmatpush.msra.mxu0 %v251
    %437 = vmatpush.msra.mxu0 %v250
    %438 = vmatpush.msra.mxu0 %v249
    %439 = vmatpush.msra.mxu0 %v248
    %440 = vmatpush.msra.mxu0 %v247
    %441 = vmatpush.msra.mxu0 %v246
    %442 = vmatpush.msra.mxu0 %v245
    %443 = vmatpush.msra.mxu0 %v244
    %444 = vmatpush.msra.mxu0 %v243
    %445 = vmatpush.msra.mxu0 %v242
    %446 = vmatpush.msra.mxu0 %v241
    %447 = vmatmul.f32.gmra.mxu0 %v406
    %v448 = vpop.f32.mrf.mxu0
    %v449 = vadd.f32 0.0, %v448
    %450 = vdwg.mxu0
    %v451 = vadd.f32 %v430, %v449
    %v452 = vxor.u32 %v451, 2147483648
    %v453 = vmul.f32 %v452, 1.442695
    %v454 = vpow.pop %v453
    %v455 = vadd.f32 %v454, 1.0
    %v456 = vrcp.pop %v455
    %v457 = vmul.f32 %v455, %v456
    %v458 = vsub.f32 1.0, %v457
    %v459 = vmul.f32 %v456, %v458
    %v460 = vadd.f32 %v456, %v459
    %vm461 = vweird.f32 %v455
    %vm462 = vweird.f32 %v456
    %vm463 = vmor %vm461, %vm462
    %v464 = vsel %vm463, %v456, %v460
    %v465 = vand.u32 2147483647, %v455
    %vm466 = vcmp.eq.f32.partialorder %v465, 8.507059e+37
    %v467 = vand.u32 %v455, 2147483648
    %v468 = vor.u32 1.1754944e-38, %v467
    %v469 = vsel %vm466, %v468, %v464
    %v470 = vmul.f32 1.0, %v469
    %v471 = vtanh.pop %v451
    %472 = vrot.lane.b32.xlu0 %v470, 96
    %v473 = vpop.permute.xlu0 %472
    %474 = vrot.lane.b32.xlu0 %v471, 64
    %v475 = vpop.permute.xlu0 %474
    %476 = vrot.lane.b32.xlu0 %v470, 32
    %v477 = vpop.permute.xlu0 %476
    %v478 = vmul.f32 %v473, %v404
    %v479 = vmul.f32 %v470, %v475
    %v480 = vadd.f32 %v478, %v479
    %v481 = vtanh.pop %v480
    %v482 = vmul.f32 %v477, %v481
    %483 = vmatpush.msra.mxu0 %v274
    %484 = vmatpush.msra.mxu0 %v273
    %485 = vmatpush.msra.mxu0 %v272
    %486 = vmatpush.msra.mxu0 %v271
    %487 = vmatpush.msra.mxu0 %v270
    %488 = vmatpush.msra.mxu0 %v269
    %489 = vmatpush.msra.mxu0 %v268
    %490 = vmatpush.msra.mxu0 %v267
    %491 = vmatpush.msra.mxu0 %v266
    %492 = vmatpush.msra.mxu0 %v265
    %493 = vmatpush.msra.mxu0 %v264
    %494 = vmatpush.msra.mxu0 %v263
    %495 = vmatpush.msra.mxu0 %v262
    %496 = vmatpush.msra.mxu0 %v261
    %497 = vmatpush.msra.mxu0 %v260
    %498 = vmatpush.msra.mxu0 %v259
    %499 = vmatmul.f32.gmra.mxu0 %v482
    %v500 = vpop.f32.mrf.mxu0
    %v501 = vadd.f32 %v277, %v500
    %502 = vdwg.mxu0
    %s503 = scalar_lea.vmem [#allocation3], 16
    %504 = vst [vmem:[%s503] sm:$0xff] %v501
    %s505 = scalar_lea.vmem [#allocation2], 24
    %v506 = vld [vmem:[%s505] sm:$0xff]
    %507 = vmatpush.msra.mxu0 %v256
    %508 = vmatpush.msra.mxu0 %v255
    %509 = vmatpush.msra.mxu0 %v254
    %510 = vmatpush.msra.mxu0 %v253
    %511 = vmatpush.msra.mxu0 %v252
    %512 = vmatpush.msra.mxu0 %v251
    %513 = vmatpush.msra.mxu0 %v250
    %514 = vmatpush.msra.mxu0 %v249
    %515 = vmatpush.msra.mxu0 %v248
    %516 = vmatpush.msra.mxu0 %v247
    %517 = vmatpush.msra.mxu0 %v246
    %518 = vmatpush.msra.mxu0 %v245
    %519 = vmatpush.msra.mxu0 %v244
    %520 = vmatpush.msra.mxu0 %v243
    %521 = vmatpush.msra.mxu0 %v242
    %522 = vmatpush.msra.mxu0 %v241
    %523 = vmatmul.f32.gmra.mxu0 %v482
    %v524 = vpop.f32.mrf.mxu0
    %v525 = vadd.f32 0.0, %v524
    %526 = vdwg.mxu0
    %v527 = vadd.f32 %v506, %v525
    %v528 = vxor.u32 %v527, 2147483648
    %v529 = vmul.f32 %v528, 1.442695
    %v530 = vpow.pop %v529
    %v531 = vadd.f32 %v530, 1.0
    %v532 = vrcp.pop %v531
    %v533 = vmul.f32 %v531, %v532
    %v534 = vsub.f32 1.0, %v533
    %v535 = vmul.f32 %v532, %v534
    %v536 = vadd.f32 %v532, %v535
    %vm537 = vweird.f32 %v531
    %vm538 = vweird.f32 %v532
    %vm539 = vmor %vm537, %vm538
    %v540 = vsel %vm539, %v532, %v536
    %v541 = vand.u32 2147483647, %v531
    %vm542 = vcmp.eq.f32.partialorder %v541, 8.507059e+37
    %v543 = vand.u32 %v531, 2147483648
    %v544 = vor.u32 1.1754944e-38, %v543
    %v545 = vsel %vm542, %v544, %v540
    %v546 = vmul.f32 1.0, %v545
    %v547 = vtanh.pop %v527
    %548 = vrot.lane.b32.xlu0 %v546, 96
    %v549 = vpop.permute.xlu0 %548
    %550 = vrot.lane.b32.xlu0 %v547, 64
    %v551 = vpop.permute.xlu0 %550
    %552 = vrot.lane.b32.xlu0 %v546, 32
    %v553 = vpop.permute.xlu0 %552
    %v554 = vmul.f32 %v549, %v480
    %v555 = vmul.f32 %v546, %v551
    %v556 = vadd.f32 %v554, %v555
    %v557 = vtanh.pop %v556
    %v558 = vmul.f32 %v553, %v557
    %559 = vmatpush.msra.mxu0 %v274
    %560 = vmatpush.msra.mxu0 %v273
    %561 = vmatpush.msra.mxu0 %v272
    %562 = vmatpush.msra.mxu0 %v271
    %563 = vmatpush.msra.mxu0 %v270
    %564 = vmatpush.msra.mxu0 %v269
    %565 = vmatpush.msra.mxu0 %v268
    %566 = vmatpush.msra.mxu0 %v267
    %567 = vmatpush.msra.mxu0 %v266
    %568 = vmatpush.msra.mxu0 %v265
    %569 = vmatpush.msra.mxu0 %v264
    %570 = vmatpush.msra.mxu0 %v263
    %571 = vmatpush.msra.mxu0 %v262
    %572 = vmatpush.msra.mxu0 %v261
    %573 = vmatpush.msra.mxu0 %v260
    %574 = vmatpush.msra.mxu0 %v259
    %575 = vmatmul.f32.gmra.mxu0 %v558
    %v576 = vpop.f32.mrf.mxu0
    %v577 = vadd.f32 %v277, %v576
    %578 = vdwg.mxu0
    %s579 = scalar_lea.vmem [#allocation3], 24
    %580 = vst [vmem:[%s579] sm:$0xff] %v577
    %s581 = scalar_lea.vmem [#allocation2], 32
    %v582 = vld [vmem:[%s581] sm:$0xff]
    %583 = vmatpush.msra.mxu0 %v256
    %584 = vmatpush.msra.mxu0 %v255
    %585 = vmatpush.msra.mxu0 %v254
    %586 = vmatpush.msra.mxu0 %v253
    %587 = vmatpush.msra.mxu0 %v252
    %588 = vmatpush.msra.mxu0 %v251
    %589 = vmatpush.msra.mxu0 %v250
    %590 = vmatpush.msra.mxu0 %v249
    %591 = vmatpush.msra.mxu0 %v248
    %592 = vmatpush.msra.mxu0 %v247
    %593 = vmatpush.msra.mxu0 %v246
    %594 = vmatpush.msra.mxu0 %v245
    %595 = vmatpush.msra.mxu0 %v244
    %596 = vmatpush.msra.mxu0 %v243
    %597 = vmatpush.msra.mxu0 %v242
    %598 = vmatpush.msra.mxu0 %v241
    %599 = vmatmul.f32.gmra.mxu0 %v558
    %v600 = vpop.f32.mrf.mxu0
    %v601 = vadd.f32 0.0, %v600
    %602 = vdwg.mxu0
    %v603 = vadd.f32 %v582, %v601
    %v604 = vxor.u32 %v603, 2147483648
    %v605 = vmul.f32 %v604, 1.442695
    %v606 = vpow.pop %v605
    %v607 = vadd.f32 %v606, 1.0
    %v608 = vrcp.pop %v607
    %v609 = vmul.f32 %v607, %v608
    %v610 = vsub.f32 1.0, %v609
    %v611 = vmul.f32 %v608, %v610
    %v612 = vadd.f32 %v608, %v611
    %vm613 = vweird.f32 %v607
    %vm614 = vweird.f32 %v608
    %vm615 = vmor %vm613, %vm614
    %v616 = vsel %vm615, %v608, %v612
    %v617 = vand.u32 2147483647, %v607
    %vm618 = vcmp.eq.f32.partialorder %v617, 8.507059e+37
    %v619 = vand.u32 %v607, 2147483648
    %v620 = vor.u32 1.1754944e-38, %v619
    %v621 = vsel %vm618, %v620, %v616
    %v622 = vmul.f32 1.0, %v621
    %v623 = vtanh.pop %v603
    %624 = vrot.lane.b32.xlu0 %v622, 96
    %v625 = vpop.permute.xlu0 %624
    %626 = vrot.lane.b32.xlu0 %v623, 64
    %v627 = vpop.permute.xlu0 %626
    %628 = vrot.lane.b32.xlu0 %v622, 32
    %v629 = vpop.permute.xlu0 %628
    %v630 = vmul.f32 %v625, %v556
    %v631 = vmul.f32 %v622, %v627
    %v632 = vadd.f32 %v630, %v631
    %v633 = vtanh.pop %v632
    %v634 = vmul.f32 %v629, %v633
    %635 = vmatpush.msra.mxu0 %v274
    %636 = vmatpush.msra.mxu0 %v273
    %637 = vmatpush.msra.mxu0 %v272
    %638 = vmatpush.msra.mxu0 %v271
    %639 = vmatpush.msra.mxu0 %v270
    %640 = vmatpush.msra.mxu0 %v269
    %641 = vmatpush.msra.mxu0 %v268
    %642 = vmatpush.msra.mxu0 %v267
    %643 = vmatpush.msra.mxu0 %v266
    %644 = vmatpush.msra.mxu0 %v265
    %645 = vmatpush.msra.mxu0 %v264
    %646 = vmatpush.msra.mxu0 %v263
    %647 = vmatpush.msra.mxu0 %v262
    %648 = vmatpush.msra.mxu0 %v261
    %649 = vmatpush.msra.mxu0 %v260
    %650 = vmatpush.msra.mxu0 %v259
    %651 = vmatmul.f32.gmra.mxu0 %v634
    %v652 = vpop.f32.mrf.mxu0
    %v653 = vadd.f32 %v277, %v652
    %654 = vdwg.mxu0
    %s655 = scalar_lea.vmem [#allocation3], 32
    %656 = vst [vmem:[%s655] sm:$0xff] %v653
    %s657 = scalar_lea.vmem [#allocation2], 40
    %v658 = vld [vmem:[%s657] sm:$0xff]
    %659 = vmatpush.msra.mxu0 %v256
    %660 = vmatpush.msra.mxu0 %v255
    %661 = vmatpush.msra.mxu0 %v254
    %662 = vmatpush.msra.mxu0 %v253
    %663 = vmatpush.msra.mxu0 %v252
    %664 = vmatpush.msra.mxu0 %v251
    %665 = vmatpush.msra.mxu0 %v250
    %666 = vmatpush.msra.mxu0 %v249
    %667 = vmatpush.msra.mxu0 %v248
    %668 = vmatpush.msra.mxu0 %v247
    %669 = vmatpush.msra.mxu0 %v246
    %670 = vmatpush.msra.mxu0 %v245
    %671 = vmatpush.msra.mxu0 %v244
    %672 = vmatpush.msra.mxu0 %v243
    %673 = vmatpush.msra.mxu0 %v242
    %674 = vmatpush.msra.mxu0 %v241
    %675 = vmatmul.f32.gmra.mxu0 %v634
    %v676 = vpop.f32.mrf.mxu0
    %v677 = vadd.f32 0.0, %v676
    %678 = vdwg.mxu0
    %v679 = vadd.f32 %v658, %v677
    %v680 = vxor.u32 %v679, 2147483648
    %v681 = vmul.f32 %v680, 1.442695
    %v682 = vpow.pop %v681
    %v683 = vadd.f32 %v682, 1.0
    %v684 = vrcp.pop %v683
    %v685 = vmul.f32 %v683, %v684
    %v686 = vsub.f32 1.0, %v685
    %v687 = vmul.f32 %v684, %v686
    %v688 = vadd.f32 %v684, %v687
    %vm689 = vweird.f32 %v683
    %vm690 = vweird.f32 %v684
    %vm691 = vmor %vm689, %vm690
    %v692 = vsel %vm691, %v684, %v688
    %v693 = vand.u32 2147483647, %v683
    %vm694 = vcmp.eq.f32.partialorder %v693, 8.507059e+37
    %v695 = vand.u32 %v683, 2147483648
    %v696 = vor.u32 1.1754944e-38, %v695
    %v697 = vsel %vm694, %v696, %v692
    %v698 = vmul.f32 1.0, %v697
    %v699 = vtanh.pop %v679
    %700 = vrot.lane.b32.xlu0 %v698, 96
    %v701 = vpop.permute.xlu0 %700
    %702 = vrot.lane.b32.xlu0 %v699, 64
    %v703 = vpop.permute.xlu0 %702
    %704 = vrot.lane.b32.xlu0 %v698, 32
    %v705 = vpop.permute.xlu0 %704
    %v706 = vmul.f32 %v701, %v632
    %v707 = vmul.f32 %v698, %v703
    %v708 = vadd.f32 %v706, %v707
    %v709 = vtanh.pop %v708
    %v710 = vmul.f32 %v705, %v709
    %711 = vmatpush.msra.mxu0 %v274
    %712 = vmatpush.msra.mxu0 %v273
    %713 = vmatpush.msra.mxu0 %v272
    %714 = vmatpush.msra.mxu0 %v271
    %715 = vmatpush.msra.mxu0 %v270
    %716 = vmatpush.msra.mxu0 %v269
    %717 = vmatpush.msra.mxu0 %v268
    %718 = vmatpush.msra.mxu0 %v267
    %719 = vmatpush.msra.mxu0 %v266
    %720 = vmatpush.msra.mxu0 %v265
    %721 = vmatpush.msra.mxu0 %v264
    %722 = vmatpush.msra.mxu0 %v263
    %723 = vmatpush.msra.mxu0 %v262
    %724 = vmatpush.msra.mxu0 %v261
    %725 = vmatpush.msra.mxu0 %v260
    %726 = vmatpush.msra.mxu0 %v259
    %727 = vmatmul.f32.gmra.mxu0 %v710
    %v728 = vpop.f32.mrf.mxu0
    %v729 = vadd.f32 %v277, %v728
    %730 = vdwg.mxu0
    %s731 = scalar_lea.vmem [#allocation3], 40
    %732 = vst [vmem:[%s731] sm:$0xff] %v729
    %s733 = scalar_lea.vmem [#allocation2], 48
    %v734 = vld [vmem:[%s733] sm:$0xff]
    %735 = vmatpush.msra.mxu0 %v256
    %736 = vmatpush.msra.mxu0 %v255
    %737 = vmatpush.msra.mxu0 %v254
    %738 = vmatpush.msra.mxu0 %v253
    %739 = vmatpush.msra.mxu0 %v252
    %740 = vmatpush.msra.mxu0 %v251
    %741 = vmatpush.msra.mxu0 %v250
    %742 = vmatpush.msra.mxu0 %v249
    %743 = vmatpush.msra.mxu0 %v248
    %744 = vmatpush.msra.mxu0 %v247
    %745 = vmatpush.msra.mxu0 %v246
    %746 = vmatpush.msra.mxu0 %v245
    %747 = vmatpush.msra.mxu0 %v244
    %748 = vmatpush.msra.mxu0 %v243
    %749 = vmatpush.msra.mxu0 %v242
    %750 = vmatpush.msra.mxu0 %v241
    %751 = vmatmul.f32.gmra.mxu0 %v710
    %v752 = vpop.f32.mrf.mxu0
    %v753 = vadd.f32 0.0, %v752
    %754 = vdwg.mxu0
    %v755 = vadd.f32 %v734, %v753
    %v756 = vxor.u32 %v755, 2147483648
    %v757 = vmul.f32 %v756, 1.442695
    %v758 = vpow.pop %v757
    %v759 = vadd.f32 %v758, 1.0
    %v760 = vrcp.pop %v759
    %v761 = vmul.f32 %v759, %v760
    %v762 = vsub.f32 1.0, %v761
    %v763 = vmul.f32 %v760, %v762
    %v764 = vadd.f32 %v760, %v763
    %vm765 = vweird.f32 %v759
    %vm766 = vweird.f32 %v760
    %vm767 = vmor %vm765, %vm766
    %v768 = vsel %vm767, %v760, %v764
    %v769 = vand.u32 2147483647, %v759
    %vm770 = vcmp.eq.f32.partialorder %v769, 8.507059e+37
    %v771 = vand.u32 %v759, 2147483648
    %v772 = vor.u32 1.1754944e-38, %v771
    %v773 = vsel %vm770, %v772, %v768
    %v774 = vmul.f32 1.0, %v773
    %v775 = vtanh.pop %v755
    %776 = vrot.lane.b32.xlu0 %v774, 96
    %v777 = vpop.permute.xlu0 %776
    %778 = vrot.lane.b32.xlu0 %v775, 64
    %v779 = vpop.permute.xlu0 %778
    %780 = vrot.lane.b32.xlu0 %v774, 32
    %v781 = vpop.permute.xlu0 %780
    %v782 = vmul.f32 %v777, %v708
    %v783 = vmul.f32 %v774, %v779
    %v784 = vadd.f32 %v782, %v783
    %v785 = vtanh.pop %v784
    %v786 = vmul.f32 %v781, %v785
    %787 = vmatpush.msra.mxu0 %v274
    %788 = vmatpush.msra.mxu0 %v273
    %789 = vmatpush.msra.mxu0 %v272
    %790 = vmatpush.msra.mxu0 %v271
    %791 = vmatpush.msra.mxu0 %v270
    %792 = vmatpush.msra.mxu0 %v269
    %793 = vmatpush.msra.mxu0 %v268
    %794 = vmatpush.msra.mxu0 %v267
    %795 = vmatpush.msra.mxu0 %v266
    %796 = vmatpush.msra.mxu0 %v265
    %797 = vmatpush.msra.mxu0 %v264
    %798 = vmatpush.msra.mxu0 %v263
    %799 = vmatpush.msra.mxu0 %v262
    %800 = vmatpush.msra.mxu0 %v261
    %801 = vmatpush.msra.mxu0 %v260
    %802 = vmatpush.msra.mxu0 %v259
    %803 = vmatmul.f32.gmra.mxu0 %v786
    %v804 = vpop.f32.mrf.mxu0
    %v805 = vadd.f32 %v277, %v804
    %806 = vdwg.mxu0
    %s807 = scalar_lea.vmem [#allocation3], 48
    %808 = vst [vmem:[%s807] sm:$0xff] %v805
    %s809 = scalar_lea.vmem [#allocation2], 56
    %v810 = vld [vmem:[%s809] sm:$0xff]
    %811 = vmatpush.msra.mxu0 %v256
    %812 = vmatpush.msra.mxu0 %v255
    %813 = vmatpush.msra.mxu0 %v254
    %814 = vmatpush.msra.mxu0 %v253
    %815 = vmatpush.msra.mxu0 %v252
    %816 = vmatpush.msra.mxu0 %v251
    %817 = vmatpush.msra.mxu0 %v250
    %818 = vmatpush.msra.mxu0 %v249
    %819 = vmatpush.msra.mxu0 %v248
    %820 = vmatpush.msra.mxu0 %v247
    %821 = vmatpush.msra.mxu0 %v246
    %822 = vmatpush.msra.mxu0 %v245
    %823 = vmatpush.msra.mxu0 %v244
    %824 = vmatpush.msra.mxu0 %v243
    %825 = vmatpush.msra.mxu0 %v242
    %826 = vmatpush.msra.mxu0 %v241
    %827 = vmatmul.f32.gmra.mxu0 %v786
    %v828 = vpop.f32.mrf.mxu0
    %v829 = vadd.f32 0.0, %v828
    %830 = vdwg.mxu0
    %v831 = vadd.f32 %v810, %v829
    %v832 = vxor.u32 %v831, 2147483648
    %v833 = vmul.f32 %v832, 1.442695
    %v834 = vpow.pop %v833
    %v835 = vadd.f32 %v834, 1.0
    %v836 = vrcp.pop %v835
    %v837 = vmul.f32 %v835, %v836
    %v838 = vsub.f32 1.0, %v837
    %v839 = vmul.f32 %v836, %v838
    %v840 = vadd.f32 %v836, %v839
    %vm841 = vweird.f32 %v835
    %vm842 = vweird.f32 %v836
    %vm843 = vmor %vm841, %vm842
    %v844 = vsel %vm843, %v836, %v840
    %v845 = vand.u32 2147483647, %v835
    %vm846 = vcmp.eq.f32.partialorder %v845, 8.507059e+37
    %v847 = vand.u32 %v835, 2147483648
    %v848 = vor.u32 1.1754944e-38, %v847
    %v849 = vsel %vm846, %v848, %v844
    %v850 = vmul.f32 1.0, %v849
    %v851 = vtanh.pop %v831
    %852 = vrot.lane.b32.xlu0 %v850, 96
    %v853 = vpop.permute.xlu0 %852
    %854 = vrot.lane.b32.xlu0 %v851, 64
    %v855 = vpop.permute.xlu0 %854
    %856 = vrot.lane.b32.xlu0 %v850, 32
    %v857 = vpop.permute.xlu0 %856
    %v858 = vmul.f32 %v853, %v784
    %v859 = vmul.f32 %v850, %v855
    %v860 = vadd.f32 %v858, %v859
    %v861 = vtanh.pop %v860
    %v862 = vmul.f32 %v857, %v861
    %863 = vmatpush.msra.mxu0 %v274
    %864 = vmatpush.msra.mxu0 %v273
    %865 = vmatpush.msra.mxu0 %v272
    %866 = vmatpush.msra.mxu0 %v271
    %867 = vmatpush.msra.mxu0 %v270
    %868 = vmatpush.msra.mxu0 %v269
    %869 = vmatpush.msra.mxu0 %v268
    %870 = vmatpush.msra.mxu0 %v267
    %871 = vmatpush.msra.mxu0 %v266
    %872 = vmatpush.msra.mxu0 %v265
    %873 = vmatpush.msra.mxu0 %v264
    %874 = vmatpush.msra.mxu0 %v263
    %875 = vmatpush.msra.mxu0 %v262
    %876 = vmatpush.msra.mxu0 %v261
    %877 = vmatpush.msra.mxu0 %v260
    %878 = vmatpush.msra.mxu0 %v259
    %879 = vmatmul.f32.gmra.mxu0 %v862
    %v880 = vpop.f32.mrf.mxu0
    %v881 = vadd.f32 %v277, %v880
    %882 = vdwg.mxu0
    %s883 = scalar_lea.vmem [#allocation3], 56
    %884 = vst [vmem:[%s883] sm:$0xff] %v881
    %v885 = vld [vmem:[#allocation15] sm:$0xff]
    %v886 = vld [vmem:[#allocation15 + $0x8] sm:$0xff]
    %v887 = vld [vmem:[#allocation15 + $0x10] sm:$0xff]
    %v888 = vld [vmem:[#allocation15 + $0x18] sm:$0xff]
    %v889 = vld [vmem:[#allocation15 + $0x20] sm:$0xff]
    %v890 = vld [vmem:[#allocation15 + $0x28] sm:$0xff]
    %v891 = vld [vmem:[#allocation15 + $0x30] sm:$0xff]
    %v892 = vld [vmem:[#allocation15 + $0x38] sm:$0xff]
    %v893 = vld [vmem:[#allocation15 + $0x40] sm:$0xff]
    %v894 = vld [vmem:[#allocation15 + $0x48] sm:$0xff]
    %v895 = vld [vmem:[#allocation15 + $0x50] sm:$0xff]
    %v896 = vld [vmem:[#allocation15 + $0x58] sm:$0xff]
    %v897 = vld [vmem:[#allocation15 + $0x60] sm:$0xff]
    %v898 = vld [vmem:[#allocation15 + $0x68] sm:$0xff]
    %v899 = vld [vmem:[#allocation15 + $0x70] sm:$0xff]
    %v900 = vld [vmem:[#allocation15 + $0x78] sm:$0xff]
    %s901 = scalar_lea.vmem [#allocation7], 8
    %v902 = vld [vmem:[%s901] sm:$0xff]
    %s903 = scalar_lea.vmem [#allocation9], 8
    %v904 = vld [vmem:[%s903] sm:$0xff]
    %v905 = vld [vmem:[#allocation3] sm:$0xff]
    %906 = vmatpush.msra.mxu0 %v900
    %907 = vmatpush.msra.mxu0 %v899
    %908 = vmatpush.msra.mxu0 %v898
    %909 = vmatpush.msra.mxu0 %v897
    %910 = vmatpush.msra.mxu0 %v896
    %911 = vmatpush.msra.mxu0 %v895
    %912 = vmatpush.msra.mxu0 %v894
    %913 = vmatpush.msra.mxu0 %v893
    %914 = vmatpush.msra.mxu0 %v892
    %915 = vmatpush.msra.mxu0 %v891
    %916 = vmatpush.msra.mxu0 %v890
    %917 = vmatpush.msra.mxu0 %v889
    %918 = vmatpush.msra.mxu0 %v888
    %919 = vmatpush.msra.mxu0 %v887
    %920 = vmatpush.msra.mxu0 %v886
    %921 = vmatpush.msra.mxu0 %v885
    %922 = vmatmul.f32.gmra.mxu0 %v902
    %v923 = vpop.f32.mrf.mxu0
    %v924 = vadd.f32 0.0, %v923
    %925 = vdwg.mxu0
    %v926 = vadd.f32 %v905, %v924
    %v927 = vxor.u32 %v926, 2147483648
    %v928 = vmul.f32 %v927, 1.442695
    %v929 = vpow.pop %v928
    %v930 = vadd.f32 %v929, 1.0
    %v931 = vrcp.pop %v930
    %v932 = vmul.f32 %v930, %v931
    %v933 = vsub.f32 1.0, %v932
    %v934 = vmul.f32 %v931, %v933
    %v935 = vadd.f32 %v931, %v934
    %vm936 = vweird.f32 %v930
    %vm937 = vweird.f32 %v931
    %vm938 = vmor %vm936, %vm937
    %v939 = vsel %vm938, %v931, %v935
    %v940 = vand.u32 2147483647, %v930
    %vm941 = vcmp.eq.f32.partialorder %v940, 8.507059e+37
    %v942 = vand.u32 %v930, 2147483648
    %v943 = vor.u32 1.1754944e-38, %v942
    %v944 = vsel %vm941, %v943, %v939
    %v945 = vmul.f32 1.0, %v944
    %v946 = vtanh.pop %v926
    %947 = vrot.lane.b32.xlu0 %v945, 96
    %v948 = vpop.permute.xlu0 %947
    %949 = vrot.lane.b32.xlu0 %v946, 64
    %v950 = vpop.permute.xlu0 %949
    %951 = vrot.lane.b32.xlu0 %v945, 32
    %v952 = vpop.permute.xlu0 %951
    %v953 = vmul.f32 %v948, %v904
    %v954 = vmul.f32 %v945, %v950
    %v955 = vadd.f32 %v953, %v954
    %v956 = vtanh.pop %v955
    %v957 = vmul.f32 %v952, %v956
    %v958 = vld [vmem:[%s427] sm:$0xff]
    %959 = vmatpush.msra.mxu0 %v900
    %960 = vmatpush.msra.mxu0 %v899
    %961 = vmatpush.msra.mxu0 %v898
    %962 = vmatpush.msra.mxu0 %v897
    %963 = vmatpush.msra.mxu0 %v896
    %964 = vmatpush.msra.mxu0 %v895
    %965 = vmatpush.msra.mxu0 %v894
    %966 = vmatpush.msra.mxu0 %v893
    %967 = vmatpush.msra.mxu0 %v892
    %968 = vmatpush.msra.mxu0 %v891
    %969 = vmatpush.msra.mxu0 %v890
    %970 = vmatpush.msra.mxu0 %v889
    %971 = vmatpush.msra.mxu0 %v888
    %972 = vmatpush.msra.mxu0 %v887
    %973 = vmatpush.msra.mxu0 %v886
    %974 = vmatpush.msra.mxu0 %v885
    %975 = vmatmul.f32.gmra.mxu0 %v957
    %v976 = vpop.f32.mrf.mxu0
    %v977 = vadd.f32 0.0, %v976
    %978 = vdwg.mxu0
    %v979 = vadd.f32 %v958, %v977
    %v980 = vxor.u32 %v979, 2147483648
    %v981 = vmul.f32 %v980, 1.442695
    %v982 = vpow.pop %v981
    %v983 = vadd.f32 %v982, 1.0
    %v984 = vrcp.pop %v983
    %v985 = vmul.f32 %v983, %v984
    %v986 = vsub.f32 1.0, %v985
    %v987 = vmul.f32 %v984, %v986
    %v988 = vadd.f32 %v984, %v987
    %vm989 = vweird.f32 %v983
    %vm990 = vweird.f32 %v984
    %vm991 = vmor %vm989, %vm990
    %v992 = vsel %vm991, %v984, %v988
    %v993 = vand.u32 2147483647, %v983
    %vm994 = vcmp.eq.f32.partialorder %v993, 8.507059e+37
    %v995 = vand.u32 %v983, 2147483648
    %v996 = vor.u32 1.1754944e-38, %v995
    %v997 = vsel %vm994, %v996, %v992
    %v998 = vmul.f32 1.0, %v997
    %v999 = vtanh.pop %v979
    %1000 = vrot.lane.b32.xlu0 %v998, 96
    %v1001 = vpop.permute.xlu0 %1000
    %1002 = vrot.lane.b32.xlu0 %v999, 64
    %v1003 = vpop.permute.xlu0 %1002
    %1004 = vrot.lane.b32.xlu0 %v998, 32
    %v1005 = vpop.permute.xlu0 %1004
    %v1006 = vmul.f32 %v1001, %v955
    %v1007 = vmul.f32 %v998, %v1003
    %v1008 = vadd.f32 %v1006, %v1007
    %v1009 = vtanh.pop %v1008
    %v1010 = vmul.f32 %v1005, %v1009
    %v1011 = vld [vmem:[%s503] sm:$0xff]
    %1012 = vmatpush.msra.mxu0 %v900
    %1013 = vmatpush.msra.mxu0 %v899
    %1014 = vmatpush.msra.mxu0 %v898
    %1015 = vmatpush.msra.mxu0 %v897
    %1016 = vmatpush.msra.mxu0 %v896
    %1017 = vmatpush.msra.mxu0 %v895
    %1018 = vmatpush.msra.mxu0 %v894
    %1019 = vmatpush.msra.mxu0 %v893
    %1020 = vmatpush.msra.mxu0 %v892
    %1021 = vmatpush.msra.mxu0 %v891
    %1022 = vmatpush.msra.mxu0 %v890
    %1023 = vmatpush.msra.mxu0 %v889
    %1024 = vmatpush.msra.mxu0 %v888
    %1025 = vmatpush.msra.mxu0 %v887
    %1026 = vmatpush.msra.mxu0 %v886
    %1027 = vmatpush.msra.mxu0 %v885
    %1028 = vmatmul.f32.gmra.mxu0 %v1010
    %v1029 = vpop.f32.mrf.mxu0
    %v1030 = vadd.f32 0.0, %v1029
    %1031 = vdwg.mxu0
    %v1032 = vadd.f32 %v1011, %v1030
    %v1033 = vxor.u32 %v1032, 2147483648
    %v1034 = vmul.f32 %v1033, 1.442695
    %v1035 = vpow.pop %v1034
    %v1036 = vadd.f32 %v1035, 1.0
    %v1037 = vrcp.pop %v1036
    %v1038 = vmul.f32 %v1036, %v1037
    %v1039 = vsub.f32 1.0, %v1038
    %v1040 = vmul.f32 %v1037, %v1039
    %v1041 = vadd.f32 %v1037, %v1040
    %vm1042 = vweird.f32 %v1036
    %vm1043 = vweird.f32 %v1037
    %vm1044 = vmor %vm1042, %vm1043
    %v1045 = vsel %vm1044, %v1037, %v1041
    %v1046 = vand.u32 2147483647, %v1036
    %vm1047 = vcmp.eq.f32.partialorder %v1046, 8.507059e+37
    %v1048 = vand.u32 %v1036, 2147483648
    %v1049 = vor.u32 1.1754944e-38, %v1048
    %v1050 = vsel %vm1047, %v1049, %v1045
    %v1051 = vmul.f32 1.0, %v1050
    %v1052 = vtanh.pop %v1032
    %1053 = vrot.lane.b32.xlu0 %v1051, 96
    %v1054 = vpop.permute.xlu0 %1053
    %1055 = vrot.lane.b32.xlu0 %v1052, 64
    %v1056 = vpop.permute.xlu0 %1055
    %1057 = vrot.lane.b32.xlu0 %v1051, 32
    %v1058 = vpop.permute.xlu0 %1057
    %v1059 = vmul.f32 %v1054, %v1008
    %v1060 = vmul.f32 %v1051, %v1056
    %v1061 = vadd.f32 %v1059, %v1060
    %v1062 = vtanh.pop %v1061
    %v1063 = vmul.f32 %v1058, %v1062
    %v1064 = vld [vmem:[%s579] sm:$0xff]
    %1065 = vmatpush.msra.mxu0 %v900
    %1066 = vmatpush.msra.mxu0 %v899
    %1067 = vmatpush.msra.mxu0 %v898
    %1068 = vmatpush.msra.mxu0 %v897
    %1069 = vmatpush.msra.mxu0 %v896
    %1070 = vmatpush.msra.mxu0 %v895
    %1071 = vmatpush.msra.mxu0 %v894
    %1072 = vmatpush.msra.mxu0 %v893
    %1073 = vmatpush.msra.mxu0 %v892
    %1074 = vmatpush.msra.mxu0 %v891
    %1075 = vmatpush.msra.mxu0 %v890
    %1076 = vmatpush.msra.mxu0 %v889
    %1077 = vmatpush.msra.mxu0 %v888
    %1078 = vmatpush.msra.mxu0 %v887
    %1079 = vmatpush.msra.mxu0 %v886
    %1080 = vmatpush.msra.mxu0 %v885
    %1081 = vmatmul.f32.gmra.mxu0 %v1063
    %v1082 = vpop.f32.mrf.mxu0
    %v1083 = vadd.f32 0.0, %v1082
    %1084 = vdwg.mxu0
    %v1085 = vadd.f32 %v1064, %v1083
    %v1086 = vxor.u32 %v1085, 2147483648
    %v1087 = vmul.f32 %v1086, 1.442695
    %v1088 = vpow.pop %v1087
    %v1089 = vadd.f32 %v1088, 1.0
    %v1090 = vrcp.pop %v1089
    %v1091 = vmul.f32 %v1089, %v1090
    %v1092 = vsub.f32 1.0, %v1091
    %v1093 = vmul.f32 %v1090, %v1092
    %v1094 = vadd.f32 %v1090, %v1093
    %vm1095 = vweird.f32 %v1089
    %vm1096 = vweird.f32 %v1090
    %vm1097 = vmor %vm1095, %vm1096
    %v1098 = vsel %vm1097, %v1090, %v1094
    %v1099 = vand.u32 2147483647, %v1089
    %vm1100 = vcmp.eq.f32.partialorder %v1099, 8.507059e+37
    %v1101 = vand.u32 %v1089, 2147483648
    %v1102 = vor.u32 1.1754944e-38, %v1101
    %v1103 = vsel %vm1100, %v1102, %v1098
    %v1104 = vmul.f32 1.0, %v1103
    %v1105 = vtanh.pop %v1085
    %1106 = vrot.lane.b32.xlu0 %v1104, 96
    %v1107 = vpop.permute.xlu0 %1106
    %1108 = vrot.lane.b32.xlu0 %v1105, 64
    %v1109 = vpop.permute.xlu0 %1108
    %1110 = vrot.lane.b32.xlu0 %v1104, 32
    %v1111 = vpop.permute.xlu0 %1110
    %v1112 = vmul.f32 %v1107, %v1061
    %v1113 = vmul.f32 %v1104, %v1109
    %v1114 = vadd.f32 %v1112, %v1113
    %v1115 = vtanh.pop %v1114
    %v1116 = vmul.f32 %v1111, %v1115
    %v1117 = vld [vmem:[%s655] sm:$0xff]
    %1118 = vmatpush.msra.mxu0 %v900
    %1119 = vmatpush.msra.mxu0 %v899
    %1120 = vmatpush.msra.mxu0 %v898
    %1121 = vmatpush.msra.mxu0 %v897
    %1122 = vmatpush.msra.mxu0 %v896
    %1123 = vmatpush.msra.mxu0 %v895
    %1124 = vmatpush.msra.mxu0 %v894
    %1125 = vmatpush.msra.mxu0 %v893
    %1126 = vmatpush.msra.mxu0 %v892
    %1127 = vmatpush.msra.mxu0 %v891
    %1128 = vmatpush.msra.mxu0 %v890
    %1129 = vmatpush.msra.mxu0 %v889
    %1130 = vmatpush.msra.mxu0 %v888
    %1131 = vmatpush.msra.mxu0 %v887
    %1132 = vmatpush.msra.mxu0 %v886
    %1133 = vmatpush.msra.mxu0 %v885
    %1134 = vmatmul.f32.gmra.mxu0 %v1116
    %v1135 = vpop.f32.mrf.mxu0
    %v1136 = vadd.f32 0.0, %v1135
    %1137 = vdwg.mxu0
    %v1138 = vadd.f32 %v1117, %v1136
    %v1139 = vxor.u32 %v1138, 2147483648
    %v1140 = vmul.f32 %v1139, 1.442695
    %v1141 = vpow.pop %v1140
    %v1142 = vadd.f32 %v1141, 1.0
    %v1143 = vrcp.pop %v1142
    %v1144 = vmul.f32 %v1142, %v1143
    %v1145 = vsub.f32 1.0, %v1144
    %v1146 = vmul.f32 %v1143, %v1145
    %v1147 = vadd.f32 %v1143, %v1146
    %vm1148 = vweird.f32 %v1142
    %vm1149 = vweird.f32 %v1143
    %vm1150 = vmor %vm1148, %vm1149
    %v1151 = vsel %vm1150, %v1143, %v1147
    %v1152 = vand.u32 2147483647, %v1142
    %vm1153 = vcmp.eq.f32.partialorder %v1152, 8.507059e+37
    %v1154 = vand.u32 %v1142, 2147483648
    %v1155 = vor.u32 1.1754944e-38, %v1154
    %v1156 = vsel %vm1153, %v1155, %v1151
    %v1157 = vmul.f32 1.0, %v1156
    %v1158 = vtanh.pop %v1138
    %1159 = vrot.lane.b32.xlu0 %v1157, 96
    %v1160 = vpop.permute.xlu0 %1159
    %1161 = vrot.lane.b32.xlu0 %v1158, 64
    %v1162 = vpop.permute.xlu0 %1161
    %1163 = vrot.lane.b32.xlu0 %v1157, 32
    %v1164 = vpop.permute.xlu0 %1163
    %v1165 = vmul.f32 %v1160, %v1114
    %v1166 = vmul.f32 %v1157, %v1162
    %v1167 = vadd.f32 %v1165, %v1166
    %v1168 = vtanh.pop %v1167
    %v1169 = vmul.f32 %v1164, %v1168
    %v1170 = vld [vmem:[%s731] sm:$0xff]
    %1171 = vmatpush.msra.mxu0 %v900
    %1172 = vmatpush.msra.mxu0 %v899
    %1173 = vmatpush.msra.mxu0 %v898
    %1174 = vmatpush.msra.mxu0 %v897
    %1175 = vmatpush.msra.mxu0 %v896
    %1176 = vmatpush.msra.mxu0 %v895
    %1177 = vmatpush.msra.mxu0 %v894
    %1178 = vmatpush.msra.mxu0 %v893
    %1179 = vmatpush.msra.mxu0 %v892
    %1180 = vmatpush.msra.mxu0 %v891
    %1181 = vmatpush.msra.mxu0 %v890
    %1182 = vmatpush.msra.mxu0 %v889
    %1183 = vmatpush.msra.mxu0 %v888
    %1184 = vmatpush.msra.mxu0 %v887
    %1185 = vmatpush.msra.mxu0 %v886
    %1186 = vmatpush.msra.mxu0 %v885
    %1187 = vmatmul.f32.gmra.mxu0 %v1169
    %v1188 = vpop.f32.mrf.mxu0
    %v1189 = vadd.f32 0.0, %v1188
    %1190 = vdwg.mxu0
    %v1191 = vadd.f32 %v1170, %v1189
    %v1192 = vxor.u32 %v1191, 2147483648
    %v1193 = vmul.f32 %v1192, 1.442695
    %v1194 = vpow.pop %v1193
    %v1195 = vadd.f32 %v1194, 1.0
    %v1196 = vrcp.pop %v1195
    %v1197 = vmul.f32 %v1195, %v1196
    %v1198 = vsub.f32 1.0, %v1197
    %v1199 = vmul.f32 %v1196, %v1198
    %v1200 = vadd.f32 %v1196, %v1199
    %vm1201 = vweird.f32 %v1195
    %vm1202 = vweird.f32 %v1196
    %vm1203 = vmor %vm1201, %vm1202
    %v1204 = vsel %vm1203, %v1196, %v1200
    %v1205 = vand.u32 2147483647, %v1195
    %vm1206 = vcmp.eq.f32.partialorder %v1205, 8.507059e+37
    %v1207 = vand.u32 %v1195, 2147483648
    %v1208 = vor.u32 1.1754944e-38, %v1207
    %v1209 = vsel %vm1206, %v1208, %v1204
    %v1210 = vmul.f32 1.0, %v1209
    %v1211 = vtanh.pop %v1191
    %1212 = vrot.lane.b32.xlu0 %v1210, 96
    %v1213 = vpop.permute.xlu0 %1212
    %1214 = vrot.lane.b32.xlu0 %v1211, 64
    %v1215 = vpop.permute.xlu0 %1214
    %1216 = vrot.lane.b32.xlu0 %v1210, 32
    %v1217 = vpop.permute.xlu0 %1216
    %v1218 = vmul.f32 %v1213, %v1167
    %v1219 = vmul.f32 %v1210, %v1215
    %v1220 = vadd.f32 %v1218, %v1219
    %v1221 = vtanh.pop %v1220
    %v1222 = vmul.f32 %v1217, %v1221
    %v1223 = vld [vmem:[%s807] sm:$0xff]
    %1224 = vmatpush.msra.mxu0 %v900
    %1225 = vmatpush.msra.mxu0 %v899
    %1226 = vmatpush.msra.mxu0 %v898
    %1227 = vmatpush.msra.mxu0 %v897
    %1228 = vmatpush.msra.mxu0 %v896
    %1229 = vmatpush.msra.mxu0 %v895
    %1230 = vmatpush.msra.mxu0 %v894
    %1231 = vmatpush.msra.mxu0 %v893
    %1232 = vmatpush.msra.mxu0 %v892
    %1233 = vmatpush.msra.mxu0 %v891
    %1234 = vmatpush.msra.mxu0 %v890
    %1235 = vmatpush.msra.mxu0 %v889
    %1236 = vmatpush.msra.mxu0 %v888
    %1237 = vmatpush.msra.mxu0 %v887
    %1238 = vmatpush.msra.mxu0 %v886
    %1239 = vmatpush.msra.mxu0 %v885
    %1240 = vmatmul.f32.gmra.mxu0 %v1222
    %v1241 = vpop.f32.mrf.mxu0
    %v1242 = vadd.f32 0.0, %v1241
    %1243 = vdwg.mxu0
    %v1244 = vadd.f32 %v1223, %v1242
    %v1245 = vxor.u32 %v1244, 2147483648
    %v1246 = vmul.f32 %v1245, 1.442695
    %v1247 = vpow.pop %v1246
    %v1248 = vadd.f32 %v1247, 1.0
    %v1249 = vrcp.pop %v1248
    %v1250 = vmul.f32 %v1248, %v1249
    %v1251 = vsub.f32 1.0, %v1250
    %v1252 = vmul.f32 %v1249, %v1251
    %v1253 = vadd.f32 %v1249, %v1252
    %vm1254 = vweird.f32 %v1248
    %vm1255 = vweird.f32 %v1249
    %vm1256 = vmor %vm1254, %vm1255
    %v1257 = vsel %vm1256, %v1249, %v1253
    %v1258 = vand.u32 2147483647, %v1248
    %vm1259 = vcmp.eq.f32.partialorder %v1258, 8.507059e+37
    %v1260 = vand.u32 %v1248, 2147483648
    %v1261 = vor.u32 1.1754944e-38, %v1260
    %v1262 = vsel %vm1259, %v1261, %v1257
    %v1263 = vmul.f32 1.0, %v1262
    %v1264 = vtanh.pop %v1244
    %1265 = vrot.lane.b32.xlu0 %v1263, 96
    %v1266 = vpop.permute.xlu0 %1265
    %1267 = vrot.lane.b32.xlu0 %v1264, 64
    %v1268 = vpop.permute.xlu0 %1267
    %1269 = vrot.lane.b32.xlu0 %v1263, 32
    %v1270 = vpop.permute.xlu0 %1269
    %v1271 = vmul.f32 %v1266, %v1220
    %v1272 = vmul.f32 %v1263, %v1268
    %v1273 = vadd.f32 %v1271, %v1272
    %v1274 = vtanh.pop %v1273
    %v1275 = vmul.f32 %v1270, %v1274
    %v1276 = vld [vmem:[%s883] sm:$0xff]
    %1277 = vmatpush.msra.mxu0 %v900
    %1278 = vmatpush.msra.mxu0 %v899
    %1279 = vmatpush.msra.mxu0 %v898
    %1280 = vmatpush.msra.mxu0 %v897
    %1281 = vmatpush.msra.mxu0 %v896
    %1282 = vmatpush.msra.mxu0 %v895
    %1283 = vmatpush.msra.mxu0 %v894
    %1284 = vmatpush.msra.mxu0 %v893
    %1285 = vmatpush.msra.mxu0 %v892
    %1286 = vmatpush.msra.mxu0 %v891
    %1287 = vmatpush.msra.mxu0 %v890
    %1288 = vmatpush.msra.mxu0 %v889
    %1289 = vmatpush.msra.mxu0 %v888
    %1290 = vmatpush.msra.mxu0 %v887
    %1291 = vmatpush.msra.mxu0 %v886
    %1292 = vmatpush.msra.mxu0 %v885
    %1293 = vmatmul.f32.gmra.mxu0 %v1275
    %v1294 = vpop.f32.mrf.mxu0
    %v1295 = vadd.f32 0.0, %v1294
    %1296 = vdwg.mxu0
    %v1297 = vadd.f32 %v1276, %v1295
    %v1298 = vxor.u32 %v1297, 2147483648
    %v1299 = vmul.f32 %v1298, 1.442695
    %v1300 = vpow.pop %v1299
    %v1301 = vadd.f32 %v1300, 1.0
    %v1302 = vrcp.pop %v1301
    %v1303 = vmul.f32 %v1301, %v1302
    %v1304 = vsub.f32 1.0, %v1303
    %v1305 = vmul.f32 %v1302, %v1304
    %v1306 = vadd.f32 %v1302, %v1305
    %vm1307 = vweird.f32 %v1301
    %vm1308 = vweird.f32 %v1302
    %vm1309 = vmor %vm1307, %vm1308
    %v1310 = vsel %vm1309, %v1302, %v1306
    %v1311 = vand.u32 2147483647, %v1301
    %vm1312 = vcmp.eq.f32.partialorder %v1311, 8.507059e+37
    %v1313 = vand.u32 %v1301, 2147483648
    %v1314 = vor.u32 1.1754944e-38, %v1313
    %v1315 = vsel %vm1312, %v1314, %v1310
    %v1316 = vmul.f32 1.0, %v1315
    %v1317 = vtanh.pop %v1297
    %1318 = vrot.lane.b32.xlu0 %v1316, 96
    %v1319 = vpop.permute.xlu0 %1318
    %1320 = vrot.lane.b32.xlu0 %v1317, 64
    %v1321 = vpop.permute.xlu0 %1320
    %1322 = vrot.lane.b32.xlu0 %v1316, 32
    %v1323 = vpop.permute.xlu0 %1322
    %v1324 = vmul.f32 %v1319, %v1273
    %v1325 = vmul.f32 %v1316, %v1321
    %v1326 = vadd.f32 %v1324, %v1325
    %v1327 = vtanh.pop %v1326
    %v1328 = vmul.f32 %v1323, %v1327
    %v1329 = vld [vmem:[#allocation16] sm:$0xff]
    %v1330 = vld [vmem:[#allocation16 + $0x8] sm:$0xff]
    %v1331 = vld [vmem:[#allocation16 + $0x10] sm:$0xff]
    %v1332 = vld [vmem:[#allocation16 + $0x18] sm:$0xff]
    %v1333 = vld [vmem:[#allocation16 + $0x20] sm:$0xff]
    %v1334 = vld [vmem:[#allocation16 + $0x28] sm:$0xff]
    %v1335 = vld [vmem:[#allocation16 + $0x30] sm:$0xff]
    %v1336 = vld [vmem:[#allocation16 + $0x38] sm:$0xff]
    %v1337 = vld [vmem:[#allocation16 + $0x40] sm:$0xff]
    %v1338 = vld [vmem:[#allocation16 + $0x48] sm:$0xff]
    %v1339 = vld [vmem:[#allocation16 + $0x50] sm:$0xff]
    %v1340 = vld [vmem:[#allocation16 + $0x58] sm:$0xff]
    %v1341 = vld [vmem:[#allocation16 + $0x60] sm:$0xff]
    %v1342 = vld [vmem:[#allocation16 + $0x68] sm:$0xff]
    %v1343 = vld [vmem:[#allocation16 + $0x70] sm:$0xff]
    %v1344 = vld [vmem:[#allocation16 + $0x78] sm:$0xff]
    %v1345 = vld [vmem:[%s10] sm:$0x1]
    %v1347 = vperm.slane %v1345, 0
    %1349 = vmatpush.msra.mxu0 %v1344
    %1350 = vmatpush.msra.mxu0 %v1343
    %1351 = vmatpush.msra.mxu0 %v1342
    %1352 = vmatpush.msra.mxu0 %v1341
    %1353 = vmatpush.msra.mxu0 %v1340
    %1354 = vmatpush.msra.mxu0 %v1339
    %1355 = vmatpush.msra.mxu0 %v1338
    %1356 = vmatpush.msra.mxu0 %v1337
    %1357 = vmatpush.msra.mxu0 %v1336
    %1358 = vmatpush.msra.mxu0 %v1335
    %1359 = vmatpush.msra.mxu0 %v1334
    %1360 = vmatpush.msra.mxu0 %v1333
    %1361 = vmatpush.msra.mxu0 %v1332
    %1362 = vmatpush.msra.mxu0 %v1331
    %1363 = vmatpush.msra.mxu0 %v1330
    %1364 = vmatpush.msra.mxu0 %v1329
    %1365 = vmatmul.f32.gmra.mxu0 %v1328
    %v1366 = vpop.f32.mrf.mxu0
    %v1367 = vadd.f32 %v1347, %v1366
    %1368 = vdwg.mxu0
    %1369 = vst [vmem:[#allocation18] sm:$0xff] %v1367
    // Predicated region
    $region78: #{tpu_custom_call.1} parent=1 // pred_check
      _
    $region79: #{tpu_custom_call.1} parent=1 // pred_check_branch
      %1371 = sbr.rel (0) target = $region81
    $region80: #{tpu_custom_call.1} parent=1 // pred_region
      %1373 = vsyncadd [#allocation6], 0
      %s1375 = sshll.u32 [#allocation18], 4
      %s1376 = int_to_ptr.vmem [resolvable:$true] %s1375
      %s1377 = sshll.u32 %s11, 4
      %s1378 = int_to_ptr.hbm [resolvable:$true] %s1377
      %1380 = dma.vmem_to_hbm [thread:$0]  %s1376, 128, %s1378, [#allocation6]
    $region81: #{tpu_custom_call.1} parent=1 // pred_fallthru
      _
    // Predicated region
    $region82: #{tpu_custom_call.1} parent=1 // pred_check
      _
    $region83: #{tpu_custom_call.1} parent=1 // pred_check_branch
      %1382 = sbr.rel (0) target = $region85
    $region84: #{tpu_custom_call.1} parent=1 // pred_region
      %1384 = dma.done [#allocation6], 128
    $region85: #{tpu_custom_call.1} parent=1 // pred_fallthru
      _
    %1385 = vsyncpa [#allocation5], 1
    %1386 = vsyncpa [#allocation8], 1
    %1387 = vsyncpa [#allocation11], 1
    %1388 = vsyncpa [#allocation14], 1
    %1389 = vsyncpa [#allocation17], 1
    %1390 = vsyncpa [#allocation6], 1

</llo_original>
